<compile_context>
chip_gen: v5e
topology: v5e:2x2
jax: 0.10.0
libtpu: 0.0.40
codegen_flags: <defaults>
</compile_context>

<pallas_src>
import math

import jax
import jax.numpy as jnp
from jax.experimental import pallas as pl
from jax.experimental.pallas import tpu as pltpu

H1 = 64       # gate hidden 1 (Linear(2D, 64))
H2 = 32       # gate hidden 2 (Linear(64, 32))
LANES = 128   # padded lane width for W2 / biases
LWF = 256     # fused layer-1 + signal-transform weight lanes (fills 256-wide MXU)


# ----------------------------------------------------------------------------
# Pallas kernel: one block of Bb batch elements per grid step, everything 2-D.
# ----------------------------------------------------------------------------
def gap_junction_kernel(x_ref, wf_ref, w2_ref, w3_ref, slab_ref,
                        srep_ref, stile_ref, snorm_ref, out_ref):
    BN, D = x_ref.shape                  # BN = Bb * N cell rows in this block
    M = srep_ref.shape[0]                # Bb * N * N ordered-pair rows
    N = M // BN

    x = x_ref[...]                       # [BN, D] f32
    slab = slab_ref[...]                 # [8, 128] packed small params
    b1 = slab[0:1, 0:H1]                 # [1, 64]
    b2 = slab[1:2, :]                    # [1, 128] (lanes >= H2 are exact zeros)
    b3 = slab[2:3, 0:1]                  # [1, 1]
    bs = slab[3:4, 0:D]                  # [1, D]

    # One fused MXU dot: lanes [0:64]=gate-L1(own), [64:128]=gate-L1(other),
    # [128:128+D]=signal transform.
    g = jnp.dot(x, wf_ref[...], preferred_element_type=jnp.float32)   # [BN, 256]
    u = g[:, 0:H1]                       # x[i] @ W1_own.T
    v = g[:, H1:2 * H1]                  # x[j] @ W1_other.T
    t = g[:, 2 * H1:2 * H1 + D] + bs     # transferred signal T[j] = x[j] @ Ws.T + bs

    # Pair hidden layer built on the MXU via 0/1 selector matmuls:
    #   h1[b*N*N + i*N + j] = u[b*N+i] + v[b*N+j] + b1
    h1 = jnp.dot(srep_ref[...], u, preferred_element_type=jnp.float32)
    h1 = h1 + jnp.dot(stile_ref[...], v, preferred_element_type=jnp.float32)
    h1 = jnp.maximum(h1 + b1, 0.0)                                     # [M, 64]

    # Layer 2 (output padded to a full 128-lane vreg, pad lanes stay exactly 0).
    h2 = jnp.dot(h1, w2_ref[...], preferred_element_type=jnp.float32)
    h2 = jnp.maximum(h2 + b2, 0.0)                                     # [M, 128]

    # Layer 3 as an MXU dot against a zero-padded column; sigmoid = 1/(1+exp(-z)).
    logits = jnp.dot(h2, w3_ref[...], preferred_element_type=jnp.float32) + b3   # [M, 1]
    gate = pl.reciprocal(1.0 + jnp.exp(-logits), approx=True)                    # [M, 1]

    # masked_norm[i,j] is folded into snorm, so one dot yields norm[i,j] * T[b*N+j]
    # per pair row; the gate scales it.
    contrib = gate * jnp.dot(snorm_ref[...], t,
                             preferred_element_type=jnp.float32)       # [M, D]

    # Sum the N pair rows belonging to each cell.  With N a multiple of 8 the reshape
    # is layout-free (pure sublane regrouping) and the sum is a sublane reduction.
    delta = jnp.sum(contrib.reshape(BN, N, D), axis=1)                 # [BN, D]
    out_ref[...] = x + delta


# ----------------------------------------------------------------------------
# Wrapper: x-independent precompute (runs in XLA) + batch-blocked pallas_call
# ----------------------------------------------------------------------------
def _prepare_inputs(params, N, D, Bb):
    # Static invariants required by the lane-padding trick (pad columns/lanes == 0).
    assert 2 * H1 + D <= LWF, "dimension too large for the fused weight slab"
    assert H1 <= LANES and H2 <= LANES and D <= LANES

    A = params["adjacency"]
    eye = jnp.eye(N, dtype=jnp.float32)
    sym = (A + A.T) * 0.5 * (1.0 - eye)
    norm = jax.nn.softmax(sym, axis=1)          # zero diagonal included (matches module)
    masked_norm = norm * (1.0 - eye)            # only j != i contributes

    # Fused layer-1 + signal-transform weight: [D, 256].
    w1 = params["gate_w1"]                      # [64, 2D] torch layout [out, in]
    wf = jnp.zeros((D, LWF), jnp.float32)
    wf = wf.at[:, 0:H1].set(w1[:, :D].T)
    wf = wf.at[:, H1:2 * H1].set(w1[:, D:].T)
    wf = wf.at[:, 2 * H1:2 * H1 + D].set(params["sig_w"].T)

    # Layer-2 weight padded to 128 lanes; pad columns are EXACT zeros (relu keeps
    # h2 pad lanes at zero).  Layer-3 weight as an MXU column; pad rows exact zeros.
    w2p = jnp.zeros((H1, LANES), jnp.float32).at[:, :H2].set(params["gate_w2"].T)
    w3col = jnp.zeros((LANES, 1), jnp.float32).at[:H2, 0].set(params["gate_w3"][0])

    slab = jnp.zeros((8, LANES), jnp.float32)
    slab = slab.at[0, :H1].set(params["gate_b1"])
    slab = slab.at[1, :H2].set(params["gate_b2"])
    slab = slab.at[2, 0].set(params["gate_b3"][0])
    slab = slab.at[3, :D].set(params["sig_b"])

    # Pair selector matrices (block-diagonal across the Bb batch elements of a block):
    #   S_rep [Bb*N*N, Bb*N]:  row (b,i,j) -> one-hot at b*N+i
    #   S_tile[Bb*N*N, Bb*N]:  row (b,i,j) -> one-hot at b*N+j
    #   S_norm               : row (b,i,j) -> masked_norm[i,j] at column b*N+j
    eye_n = jnp.eye(N, dtype=jnp.float32)
    r_rep = jnp.repeat(eye_n, N, axis=0)             # [N*N, N]
    r_tile = jnp.tile(eye_n, (N, 1))                 # [N*N, N]
    r_norm = r_tile * masked_norm.reshape(N * N, 1)  # adjacency folded in (diag == 0)
    eye_b = jnp.eye(Bb, dtype=jnp.float32)
    s_rep = jnp.kron(eye_b, r_rep)
    s_tile = jnp.kron(eye_b, r_tile)
    s_norm = jnp.kron(eye_b, r_norm)
    return wf, w2p, w3col, slab, s_rep, s_tile, s_norm


def _pick_block_batch(B, N, target_pair_rows=2048):
    """Biggest divisor of B keeping ~target pair rows per step and >= 2 grid steps."""
    bb = max(1, min(B, target_pair_rows // max(1, N * N)))
    while B % bb:
        bb -= 1
    if bb == B and B >= 2:          # keep >= 2 grid steps so both v7x cores get work
        bb = B // 2
        while B % bb:
            bb -= 1
    return bb


def gap_junction_forward_batched(cell_states, params, block_batch=None):
    """cell_states: [B, num_cells, dimension] -> [B, num_cells, dimension]"""
    B, N, D = cell_states.shape
    Bb = block_batch if block_batch is not None else _pick_block_batch(B, N)
    assert B % Bb == 0, "batch must be divisible by the batch block size"
    wf, w2p, w3col, slab, s_rep, s_tile, s_norm = _prepare_inputs(params, N, D, Bb)

    # Leading-dim collapse in the wrapper is free; the kernel works on 2-D row slabs.
    x2 = cell_states.reshape(B * N, D).astype(jnp.float32)

    def const_spec(shape):
        return pl.BlockSpec(shape, lambda b: (0,) * len(shape))

    out2 = pl.pallas_call(
        gap_junction_kernel,
        out_shape=jax.ShapeDtypeStruct((B * N, D), jnp.float32),
        grid=(B // Bb,),
        in_specs=[
            pl.BlockSpec((Bb * N, D), lambda b: (b, 0)),     # x rows for this block
            const_spec((D, LWF)),                            # fused W1|W1|Ws
            const_spec((H1, LANES)),                         # padded W2
            const_spec((LANES, 1)),                          # padded w3 column
            const_spec((8, LANES)),                          # packed biases
            const_spec((Bb * N * N, Bb * N)),                # S_rep
            const_spec((Bb * N * N, Bb * N)),                # S_tile
            const_spec((Bb * N * N, Bb * N)),                # S_norm (adjacency folded)
        ],
        out_specs=pl.BlockSpec((Bb * N, D), lambda b: (b, 0)),
        compiler_params=pltpu.CompilerParams(dimension_semantics=("parallel",)),
    )(x2, wf, w2p, w3col, slab, s_rep, s_tile, s_norm)
    return out2.reshape(B, N, D)


def gap_junction_forward(cell_states, params):
    """Single network, matching the nn.Module signature: [num_cells, dimension]."""
    return gap_junction_forward_batched(cell_states[None], params)[0]


# ----------------------------------------------------------------------------
# Deterministic parameter init (same shapes / init style as the nn.Module)
# ----------------------------------------------------------------------------
def init_params(key, num_cells, dimension):
    ks = jax.random.split(key, 9)

    def linear(kw, kb, fan_in, fan_out):
        bound = 1.0 / math.sqrt(fan_in)
        w = jax.random.uniform(kw, (fan_out, fan_in), jnp.float32, -bound, bound)
        b = jax.random.uniform(kb, (fan_out,), jnp.float32, -bound, bound)
        return w, b

    adjacency = jax.random.uniform(ks[0], (num_cells, num_cells), jnp.float32) * 0.1
    w1, b1 = linear(ks[1], ks[2], dimension * 2, H1)
    w2, b2 = linear(ks[3], ks[4], H1, H2)
    w3, b3 = linear(ks[5], ks[6], H2, 1)
    ws, bs = linear(ks[7], ks[8], dimension, dimension)
    return dict(adjacency=adjacency,
                gate_w1=w1, gate_b1=b1,
                gate_w2=w2, gate_b2=b2,
                gate_w3=w3, gate_b3=b3,
                sig_w=ws, sig_b=bs)


# ----------------------------------------------------------------------------
# Pure-JAX reference: literal transcription of the PyTorch double loop,
# HIGHEST-precision dots (ground truth).
# ----------------------------------------------------------------------------
def reference_forward(x, p):
    N, _ = x.shape
    hp = jax.lax.Precision.HIGHEST
    eye = jnp.eye(N, dtype=jnp.float32)
    sym = (p["adjacency"] + p["adjacency"].T) / 2.0 * (1.0 - eye)
    norm = jax.nn.softmax(sym, axis=1)

    def gate(combined):
        h = jax.nn.relu(jnp.dot(combined, p["gate_w1"].T, precision=hp) + p["gate_b1"])
        h = jax.nn.relu(jnp.dot(h, p["gate_w2"].T, precision=hp) + p["gate_b2"])
        return jax.nn.sigmoid(jnp.dot(h, p["gate_w3"].T, precision=hp) + p["gate_b3"])

    rows = []
    for i in range(N):
        acc = x[i]
        for j in range(N):
            if i != j:
                combined = jnp.concatenate([x[i], x[j]])[None, :]
                g = gate(combined)[0, 0]
                transferred = jnp.dot(x[j], p["sig_w"].T, precision=hp) + p["sig_b"]
                acc = acc + g * norm[i, j] * transferred
        rows.append(acc)
    return jnp.stack(rows)


if __name__ == "__main__":
    num_cells, dimension, batch = 8, 32, 8   # small shapes consistent with the module
    key = jax.random.PRNGKey(0)
    k_params, k_x = jax.random.split(key)
    params = init_params(k_params, num_cells, dimension)
    cell_states = jax.random.normal(k_x, (batch, num_cells, dimension), jnp.float32)

    out = jax.jit(gap_junction_forward_batched)(cell_states, params)
    out = jax.block_until_ready(out)
    assert out.shape == (batch, num_cells, dimension)

    ref_fn = jax.jit(reference_forward)
    max_diff = 0.0
    for b in range(batch):
        ref_b = ref_fn(cell_states[b], params)
        max_diff = max(max_diff, float(jnp.max(jnp.abs(out[b] - ref_b))))
    if max_diff > 2e-2:
        raise AssertionError(f"kernel/reference mismatch, max abs diff = {max_diff}")
    print("KERNEL_OK")
</pallas_src>

<mosaic_0001>
module attributes {stable_mosaic.version = 11 : i64} {
  func.func @gap_junction_kernel(%arg0: i32, %arg1: memref<32x32xf32, #tpu.memory_space<vmem>>, %arg2: memref<32x256xf32, #tpu.memory_space<vmem>>, %arg3: memref<64x128xf32, #tpu.memory_space<vmem>>, %arg4: memref<128x1xf32, #tpu.memory_space<vmem>>, %arg5: memref<8x128xf32, #tpu.memory_space<vmem>>, %arg6: memref<256x32xf32, #tpu.memory_space<vmem>>, %arg7: memref<256x32xf32, #tpu.memory_space<vmem>>, %arg8: memref<256x32xf32, #tpu.memory_space<vmem>>, %arg9: memref<32x32xf32, #tpu.memory_space<vmem>>) attributes {dimension_semantics = [#tpu.dimension_semantics<parallel>], iteration_bounds = array<i64: 2>, scalar_prefetch = 0 : i64, scratch_operands = 0 : i64, tpu.core_type = #tpu.core_type<tc>, window_params = [{transform_indices = @transform_0, window_bounds = array<i64: 32, 32>}, {pipeline_mode = #tpu.pipeline_mode<synchronous>, transform_indices = @transform_1, window_bounds = array<i64: 32, 256>}, {pipeline_mode = #tpu.pipeline_mode<synchronous>, transform_indices = @transform_2, window_bounds = array<i64: 64, 128>}, {pipeline_mode = #tpu.pipeline_mode<synchronous>, transform_indices = @transform_3, window_bounds = array<i64: 128, 1>}, {pipeline_mode = #tpu.pipeline_mode<synchronous>, transform_indices = @transform_4, window_bounds = array<i64: 8, 128>}, {pipeline_mode = #tpu.pipeline_mode<synchronous>, transform_indices = @transform_5, window_bounds = array<i64: 256, 32>}, {pipeline_mode = #tpu.pipeline_mode<synchronous>, transform_indices = @transform_6, window_bounds = array<i64: 256, 32>}, {pipeline_mode = #tpu.pipeline_mode<synchronous>, transform_indices = @transform_7, window_bounds = array<i64: 256, 32>}, {transform_indices = @transform_8, window_bounds = array<i64: 32, 32>}]} {
    %c0 = arith.constant 0 : index
    %c0_0 = arith.constant 0 : index
    %0 = vector.load %arg1[%c0, %c0_0] : memref<32x32xf32, #tpu.memory_space<vmem>>, vector<32x32xf32>
    %c0_1 = arith.constant 0 : index
    %c0_2 = arith.constant 0 : index
    %1 = vector.load %arg5[%c0_1, %c0_2] : memref<8x128xf32, #tpu.memory_space<vmem>>, vector<8x128xf32>
    %2 = vector.extract_strided_slice %1 {offsets = [0, 0], sizes = [1, 64], strides = [1, 1]} : vector<8x128xf32> to vector<1x64xf32>
    %3 = vector.extract_strided_slice %1 {offsets = [1, 0], sizes = [1, 128], strides = [1, 1]} : vector<8x128xf32> to vector<1x128xf32>
    %4 = vector.extract_strided_slice %1 {offsets = [2, 0], sizes = [1, 1], strides = [1, 1]} : vector<8x128xf32> to vector<1x1xf32>
    %5 = vector.extract_strided_slice %1 {offsets = [3, 0], sizes = [1, 32], strides = [1, 1]} : vector<8x128xf32> to vector<1x32xf32>
    %c0_3 = arith.constant 0 : index
    %c0_4 = arith.constant 0 : index
    %6 = vector.load %arg2[%c0_3, %c0_4] : memref<32x256xf32, #tpu.memory_space<vmem>>, vector<32x256xf32>
    %cst = arith.constant dense<0.000000e+00> : vector<32x256xf32>
    %7 = tpu.matmul %0, %6, %cst {dimension_numbers = #tpu.dot_dimension_numbers<[1], [0], [0], [1], [0, 0, 1, 1], [], []>} : vector<32x32xf32>, vector<32x256xf32>, vector<32x256xf32> -> vector<32x256xf32>
    %8 = vector.extract_strided_slice %7 {offsets = [0, 0], sizes = [32, 64], strides = [1, 1]} : vector<32x256xf32> to vector<32x64xf32>
    %9 = vector.extract_strided_slice %7 {offsets = [0, 64], sizes = [32, 64], strides = [1, 1]} : vector<32x256xf32> to vector<32x64xf32>
    %10 = vector.extract_strided_slice %7 {offsets = [0, 128], sizes = [32, 32], strides = [1, 1]} : vector<32x256xf32> to vector<32x32xf32>
    %11 = vector.broadcast %5 : vector<1x32xf32> to vector<32x32xf32>
    %12 = arith.addf %10, %11 : vector<32x32xf32>
    %c0_5 = arith.constant 0 : index
    %c0_6 = arith.constant 0 : index
    %13 = vector.load %arg6[%c0_5, %c0_6] : memref<256x32xf32, #tpu.memory_space<vmem>>, vector<256x32xf32>
    %cst_7 = arith.constant dense<0.000000e+00> : vector<256x64xf32>
    %14 = tpu.matmul %13, %8, %cst_7 {dimension_numbers = #tpu.dot_dimension_numbers<[1], [0], [0], [1], [0, 0, 1, 1], [], []>} : vector<256x32xf32>, vector<32x64xf32>, vector<256x64xf32> -> vector<256x64xf32>
    %c0_8 = arith.constant 0 : index
    %c0_9 = arith.constant 0 : index
    %15 = vector.load %arg7[%c0_8, %c0_9] : memref<256x32xf32, #tpu.memory_space<vmem>>, vector<256x32xf32>
    %cst_10 = arith.constant dense<0.000000e+00> : vector<256x64xf32>
    %16 = tpu.matmul %15, %9, %cst_10 {dimension_numbers = #tpu.dot_dimension_numbers<[1], [0], [0], [1], [0, 0, 1, 1], [], []>} : vector<256x32xf32>, vector<32x64xf32>, vector<256x64xf32> -> vector<256x64xf32>
    %17 = arith.addf %14, %16 : vector<256x64xf32>
    %18 = vector.broadcast %2 : vector<1x64xf32> to vector<256x64xf32>
    %19 = arith.addf %17, %18 : vector<256x64xf32>
    %cst_11 = arith.constant 0.000000e+00 : f32
    %20 = vector.broadcast %cst_11 : f32 to vector<256x64xf32>
    %21 = arith.maximumf %19, %20 : vector<256x64xf32>
    %c0_12 = arith.constant 0 : index
    %c0_13 = arith.constant 0 : index
    %22 = vector.load %arg3[%c0_12, %c0_13] : memref<64x128xf32, #tpu.memory_space<vmem>>, vector<64x128xf32>
    %cst_14 = arith.constant dense<0.000000e+00> : vector<256x128xf32>
    %23 = tpu.matmul %21, %22, %cst_14 {dimension_numbers = #tpu.dot_dimension_numbers<[1], [0], [0], [1], [0, 0, 1, 1], [], []>} : vector<256x64xf32>, vector<64x128xf32>, vector<256x128xf32> -> vector<256x128xf32>
    %24 = vector.broadcast %3 : vector<1x128xf32> to vector<256x128xf32>
    %25 = arith.addf %23, %24 : vector<256x128xf32>
    %cst_15 = arith.constant 0.000000e+00 : f32
    %26 = vector.broadcast %cst_15 : f32 to vector<256x128xf32>
    %27 = arith.maximumf %25, %26 : vector<256x128xf32>
    %c0_16 = arith.constant 0 : index
    %c0_17 = arith.constant 0 : index
    %28 = vector.load %arg4[%c0_16, %c0_17] : memref<128x1xf32, #tpu.memory_space<vmem>>, vector<128x1xf32>
    %cst_18 = arith.constant dense<0.000000e+00> : vector<256x1xf32>
    %29 = tpu.matmul %27, %28, %cst_18 {dimension_numbers = #tpu.dot_dimension_numbers<[1], [0], [0], [1], [0, 0, 1, 1], [], []>} : vector<256x128xf32>, vector<128x1xf32>, vector<256x1xf32> -> vector<256x1xf32>
    %30 = vector.broadcast %4 : vector<1x1xf32> to vector<256x1xf32>
    %31 = arith.addf %29, %30 : vector<256x1xf32>
    %cst_19 = arith.constant 0.000000e+00 : f32
    %32 = vector.broadcast %cst_19 : f32 to vector<256x1xf32>
    %33 = arith.subf %32, %31 : vector<256x1xf32>
    %34 = math.exp %33 : vector<256x1xf32>
    %cst_20 = arith.constant 1.000000e+00 : f32
    %35 = vector.broadcast %cst_20 : f32 to vector<256x1xf32>
    %36 = arith.addf %35, %34 : vector<256x1xf32>
    %37 = tpu.reciprocal %36 {approx = true} : vector<256x1xf32> -> vector<256x1xf32>
    %c0_21 = arith.constant 0 : index
    %c0_22 = arith.constant 0 : index
    %38 = vector.load %arg8[%c0_21, %c0_22] : memref<256x32xf32, #tpu.memory_space<vmem>>, vector<256x32xf32>
    %cst_23 = arith.constant dense<0.000000e+00> : vector<256x32xf32>
    %39 = tpu.matmul %38, %12, %cst_23 {dimension_numbers = #tpu.dot_dimension_numbers<[1], [0], [0], [1], [0, 0, 1, 1], [], []>} : vector<256x32xf32>, vector<32x32xf32>, vector<256x32xf32> -> vector<256x32xf32>
    %40 = vector.broadcast %37 : vector<256x1xf32> to vector<256x32xf32>
    %41 = arith.mulf %40, %39 : vector<256x32xf32>
    %42 = vector.shape_cast %41 : vector<256x32xf32> to vector<32x8x32xf32>
    %cst_24 = arith.constant dense<0.000000e+00> : vector<32x32xf32>
    %43 = vector.multi_reduction <add>, %42, %cst_24 [1] : vector<32x8x32xf32> to vector<32x32xf32>
    %44 = arith.addf %0, %43 : vector<32x32xf32>
    %c0_25 = arith.constant 0 : index
    %c0_26 = arith.constant 0 : index
    %45 = vector.load %arg9[%c0_25, %c0_26] : memref<32x32xf32, #tpu.memory_space<vmem>>, vector<32x32xf32>
    tpu.vector_store %arg9[%c0_25, %c0_26], %44 {strides = array<i32>} : memref<32x32xf32, #tpu.memory_space<vmem>>, vector<32x32xf32>,
    return
  }
  func.func @transform_0(%arg0: i32) -> (i32, i32) {
    %c0_i32 = arith.constant 0 : i32
    %c0_i32_0 = arith.constant 0 : i32
    return %arg0, %c0_i32 : i32, i32
  }
  func.func @transform_1(%arg0: i32) -> (i32, i32) {
    %c0_i32 = arith.constant 0 : i32
    %c0_i32_0 = arith.constant 0 : i32
    %c0_i32_1 = arith.constant 0 : i32
    return %c0_i32, %c0_i32_0 : i32, i32
  }
  func.func @transform_2(%arg0: i32) -> (i32, i32) {
    %c0_i32 = arith.constant 0 : i32
    %c0_i32_0 = arith.constant 0 : i32
    %c0_i32_1 = arith.constant 0 : i32
    return %c0_i32, %c0_i32_0 : i32, i32
  }
  func.func @transform_3(%arg0: i32) -> (i32, i32) {
    %c0_i32 = arith.constant 0 : i32
    %c0_i32_0 = arith.constant 0 : i32
    %c0_i32_1 = arith.constant 0 : i32
    return %c0_i32, %c0_i32_0 : i32, i32
  }
  func.func @transform_4(%arg0: i32) -> (i32, i32) {
    %c0_i32 = arith.constant 0 : i32
    %c0_i32_0 = arith.constant 0 : i32
    %c0_i32_1 = arith.constant 0 : i32
    return %c0_i32, %c0_i32_0 : i32, i32
  }
  func.func @transform_5(%arg0: i32) -> (i32, i32) {
    %c0_i32 = arith.constant 0 : i32
    %c0_i32_0 = arith.constant 0 : i32
    %c0_i32_1 = arith.constant 0 : i32
    return %c0_i32, %c0_i32_0 : i32, i32
  }
  func.func @transform_6(%arg0: i32) -> (i32, i32) {
    %c0_i32 = arith.constant 0 : i32
    %c0_i32_0 = arith.constant 0 : i32
    %c0_i32_1 = arith.constant 0 : i32
    return %c0_i32, %c0_i32_0 : i32, i32
  }
  func.func @transform_7(%arg0: i32) -> (i32, i32) {
    %c0_i32 = arith.constant 0 : i32
    %c0_i32_0 = arith.constant 0 : i32
    %c0_i32_1 = arith.constant 0 : i32
    return %c0_i32, %c0_i32_0 : i32, i32
  }
  func.func @transform_8(%arg0: i32) -> (i32, i32) {
    %c0_i32 = arith.constant 0 : i32
    %c0_i32_0 = arith.constant 0 : i32
    return %arg0, %c0_i32 : i32, i32
  }
}

</mosaic_0001>

<llo_original>
// kernel: gap_junction_forward_batched.1
$region0: #{gap_junction_forward_batched.1}
  #allocation0 [shape = 'u32[]', space=smem, size = 0x4, offset = 0x4, fixed_abs, tag = 'smem constant byte address 0x4 - core index']
  #allocation1 [shape = 'u32[72,128]{1,0:T(1,128)}', space=vmem, size = 0x9000, scoped, tag = 'internal scratch']
  %s0 = inlined_call_operand.vmem [shape: f32[64,32], index: 0, kind: input, shape index: {}]
  %s1 = inlined_call_operand.vmem [shape: f32[32,256], index: 1, kind: input, shape index: {}]
  %s2 = inlined_call_operand.vmem [shape: f32[64,128], index: 2, kind: input, shape index: {}]
  %s3 = inlined_call_operand.vmem [shape: f32[128,1], index: 3, kind: input, shape index: {}]
  %s4 = inlined_call_operand.vmem [shape: f32[8,128], index: 4, kind: input, shape index: {}]
  %s5 = inlined_call_operand.vmem [shape: f32[256,32], index: 5, kind: input, shape index: {}]
  %s6 = inlined_call_operand.vmem [shape: f32[256,32], index: 6, kind: input, shape index: {}]
  %s7 = inlined_call_operand.vmem [shape: f32[256,32], index: 7, kind: input, shape index: {}]
  %s8 = inlined_call_operand.hbm [shape: f32[64,32], index: 8, kind: output, shape index: {}]
  %s9 = sld [smem:[#allocation0]]
  $region65: #{gap_junction_forward_batched.1} parent=0
    _
  %s11 = ssub.s32 1, %s9
  %s12 = scalar_select 0, %s11, %s9
  $region1: #{gap_junction_forward_batched.1} parent=0
    #allocation2 [shape = 'u8[32768]{0}', space=vmem, size = 0x8000, scoped, tag = 'output window, operand 0']
    #allocation3 [shape = 's32[2]{0}', space=sflag, size = 0x8, scoped, tag = 'scoped memory for gap_junction_forward_batched.1']
    %13 = vsyncpa [#allocation3], 0
    %s14 = scalar_lea.sflag [#allocation3], 1
    %15 = vsyncpa %s14, 0
    loop: start=0, step=1, limit=4
    $region2: #{gap_junction_forward_batched.1} parent=1 // loop_pre_header
      _
    $region3: #{gap_junction_forward_batched.1} parent=1 // loop_header
      %s17 = sphi 0, %s21
      %p18 = scmp.ge.s32.totalorder %s17, 4
      %s27 = sphi 0, %s29
      %s30 = sphi 0, %s27
      %s31 = sphi 0, %s30
      %s47 = sphi 0, %s31
      %s51 = sphi 0, %s51
      %s53 = sphi 0, %s51
      %s54 = sphi 0, %s53
      %s68 = sphi 0, %s54
      %s72 = sphi 0, %s72
      %s74 = sphi 0, %s72
      %s75 = sphi 0, %s74
      %s89 = sphi 0, %s75
      %s93 = sphi 0, %s93
      %s95 = sphi 0, %s93
      %s96 = sphi 0, %s95
      %s110 = sphi 0, %s96
      %s114 = sphi 0, %s114
      %s116 = sphi 0, %s114
      %s117 = sphi 0, %s116
      %s131 = sphi 0, %s117
      %s135 = sphi 0, %s135
      %s137 = sphi 0, %s135
      %s138 = sphi 0, %s137
      %s152 = sphi 0, %s138
      %s156 = sphi 0, %s156
      %s158 = sphi 0, %s156
      %s159 = sphi 0, %s158
      %s173 = sphi 0, %s159
      %s177 = sphi 0, %s177
      %s179 = sphi 0, %s177
      %s180 = sphi 0, %s179
      %s194 = sphi 0, %s180
      %s200 = sphi 0, %s202
      %s203 = sphi 0, %s200
      %s204 = sphi 0, %s203
      %s220 = sphi 0, %s204
    $region4: #{gap_junction_forward_batched.1} parent=1 // loop_header_branch
      %20 = sbr.rel (%p18) target = $region8
    $region5: #{gap_junction_forward_batched.1} parent=1 // loop_body
      %s22 = ssub.s32 %s17, 1
      %s23 = ssub.s32 %s17, 2
      %s24 = sadd.s32 %s17, 1
      %s25 = ssub.s32 %s17, %s24
      %p26 = scmp.eq.s32.totalorder %s25, 0
      %s28 = sadd.s32 %s27, 1
      %s29 = scalar_select %p26, %s27, %s28
      %p32 = pneg %p26
      %p33 = scmp.eq.s32.totalorder %s17, 1
      %p34 = por %p32, %p33
      %p35 = scmp.ne.s32.totalorder %s27, %s30
      %p36 = scmp.eq.s32.totalorder %s17, 0
      %p37 = por %p35, %p36
      %p38 = scmp.ne.s32.totalorder %s27, %s30
      %p39 = scmp.eq.s32.totalorder %s22, 1
      %p40 = por %p38, %p39
      %p41 = scmp.ne.s32.totalorder %s30, %s31
      %p42 = scmp.eq.s32.totalorder %s22, 0
      %p43 = por %p41, %p42
      %p44 = scmp.ne.s32.totalorder %s30, %s31
      %p45 = scmp.eq.s32.totalorder %s23, 1
      %p46 = por %p44, %p45
      %p48 = scmp.ne.s32.totalorder %s31, %s47
      %p49 = scmp.eq.s32.totalorder %s23, 0
      %p50 = por %p48, %p49
      %s52 = sadd.s32 %s51, 1
      %p55 = scmp.eq.s32.totalorder %s17, 1
      %p56 = scmp.ne.s32.totalorder %s51, %s53
      %p57 = scmp.eq.s32.totalorder %s17, 0
      %p58 = por %p56, %p57
      %p59 = scmp.ne.s32.totalorder %s51, %s53
      %p60 = scmp.eq.s32.totalorder %s22, 1
      %p61 = por %p59, %p60
      %p62 = scmp.ne.s32.totalorder %s53, %s54
      %p63 = scmp.eq.s32.totalorder %s22, 0
      %p64 = por %p62, %p63
      %p65 = scmp.ne.s32.totalorder %s53, %s54
      %p66 = scmp.eq.s32.totalorder %s23, 1
      %p67 = por %p65, %p66
      %p69 = scmp.ne.s32.totalorder %s54, %s68
      %p70 = scmp.eq.s32.totalorder %s23, 0
      %p71 = por %p69, %p70
      %s73 = sadd.s32 %s72, 1
      %p76 = scmp.eq.s32.totalorder %s17, 1
      %p77 = scmp.ne.s32.totalorder %s72, %s74
      %p78 = scmp.eq.s32.totalorder %s17, 0
      %p79 = por %p77, %p78
      %p80 = scmp.ne.s32.totalorder %s72, %s74
      %p81 = scmp.eq.s32.totalorder %s22, 1
      %p82 = por %p80, %p81
      %p83 = scmp.ne.s32.totalorder %s74, %s75
      %p84 = scmp.eq.s32.totalorder %s22, 0
      %p85 = por %p83, %p84
      %p86 = scmp.ne.s32.totalorder %s74, %s75
      %p87 = scmp.eq.s32.totalorder %s23, 1
      %p88 = por %p86, %p87
      %p90 = scmp.ne.s32.totalorder %s75, %s89
      %p91 = scmp.eq.s32.totalorder %s23, 0
      %p92 = por %p90, %p91
      %s94 = sadd.s32 %s93, 1
      %p97 = scmp.eq.s32.totalorder %s17, 1
      %p98 = scmp.ne.s32.totalorder %s93, %s95
      %p99 = scmp.eq.s32.totalorder %s17, 0
      %p100 = por %p98, %p99
      %p101 = scmp.ne.s32.totalorder %s93, %s95
      %p102 = scmp.eq.s32.totalorder %s22, 1
      %p103 = por %p101, %p102
      %p104 = scmp.ne.s32.totalorder %s95, %s96
      %p105 = scmp.eq.s32.totalorder %s22, 0
      %p106 = por %p104, %p105
      %p107 = scmp.ne.s32.totalorder %s95, %s96
      %p108 = scmp.eq.s32.totalorder %s23, 1
      %p109 = por %p107, %p108
      %p111 = scmp.ne.s32.totalorder %s96, %s110
      %p112 = scmp.eq.s32.totalorder %s23, 0
      %p113 = por %p111, %p112
      %s115 = sadd.s32 %s114, 1
      %p118 = scmp.eq.s32.totalorder %s17, 1
      %p119 = scmp.ne.s32.totalorder %s114, %s116
      %p120 = scmp.eq.s32.totalorder %s17, 0
      %p121 = por %p119, %p120
      %p122 = scmp.ne.s32.totalorder %s114, %s116
      %p123 = scmp.eq.s32.totalorder %s22, 1
      %p124 = por %p122, %p123
      %p125 = scmp.ne.s32.totalorder %s116, %s117
      %p126 = scmp.eq.s32.totalorder %s22, 0
      %p127 = por %p125, %p126
      %p128 = scmp.ne.s32.totalorder %s116, %s117
      %p129 = scmp.eq.s32.totalorder %s23, 1
      %p130 = por %p128, %p129
      %p132 = scmp.ne.s32.totalorder %s117, %s131
      %p133 = scmp.eq.s32.totalorder %s23, 0
      %p134 = por %p132, %p133
      %s136 = sadd.s32 %s135, 1
      %p139 = scmp.eq.s32.totalorder %s17, 1
      %p140 = scmp.ne.s32.totalorder %s135, %s137
      %p141 = scmp.eq.s32.totalorder %s17, 0
      %p142 = por %p140, %p141
      %p143 = scmp.ne.s32.totalorder %s135, %s137
      %p144 = scmp.eq.s32.totalorder %s22, 1
      %p145 = por %p143, %p144
      %p146 = scmp.ne.s32.totalorder %s137, %s138
      %p147 = scmp.eq.s32.totalorder %s22, 0
      %p148 = por %p146, %p147
      %p149 = scmp.ne.s32.totalorder %s137, %s138
      %p150 = scmp.eq.s32.totalorder %s23, 1
      %p151 = por %p149, %p150
      %p153 = scmp.ne.s32.totalorder %s138, %s152
      %p154 = scmp.eq.s32.totalorder %s23, 0
      %p155 = por %p153, %p154
      %s157 = sadd.s32 %s156, 1
      %p160 = scmp.eq.s32.totalorder %s17, 1
      %p161 = scmp.ne.s32.totalorder %s156, %s158
      %p162 = scmp.eq.s32.totalorder %s17, 0
      %p163 = por %p161, %p162
      %p164 = scmp.ne.s32.totalorder %s156, %s158
      %p165 = scmp.eq.s32.totalorder %s22, 1
      %p166 = por %p164, %p165
      %p167 = scmp.ne.s32.totalorder %s158, %s159
      %p168 = scmp.eq.s32.totalorder %s22, 0
      %p169 = por %p167, %p168
      %p170 = scmp.ne.s32.totalorder %s158, %s159
      %p171 = scmp.eq.s32.totalorder %s23, 1
      %p172 = por %p170, %p171
      %p174 = scmp.ne.s32.totalorder %s159, %s173
      %p175 = scmp.eq.s32.totalorder %s23, 0
      %p176 = por %p174, %p175
      %s178 = sadd.s32 %s177, 1
      %p181 = scmp.eq.s32.totalorder %s17, 1
      %p182 = scmp.ne.s32.totalorder %s177, %s179
      %p183 = scmp.eq.s32.totalorder %s17, 0
      %p184 = por %p182, %p183
      %p185 = scmp.ne.s32.totalorder %s177, %s179
      %p186 = scmp.eq.s32.totalorder %s22, 1
      %p187 = por %p185, %p186
      %p188 = scmp.ne.s32.totalorder %s179, %s180
      %p189 = scmp.eq.s32.totalorder %s22, 0
      %p190 = por %p188, %p189
      %p191 = scmp.ne.s32.totalorder %s179, %s180
      %p192 = scmp.eq.s32.totalorder %s23, 1
      %p193 = por %p191, %p192
      %p195 = scmp.ne.s32.totalorder %s180, %s194
      %p196 = scmp.eq.s32.totalorder %s23, 0
      %p197 = por %p195, %p196
      %s198 = ssub.s32 %s17, %s24
      %p199 = scmp.eq.s32.totalorder %s198, 0
      %s201 = sadd.s32 %s200, 1
      %s202 = scalar_select %p199, %s200, %s201
      %p205 = pneg %p199
      %p206 = scmp.eq.s32.totalorder %s17, 1
      %p207 = por %p205, %p206
      %p208 = scmp.ne.s32.totalorder %s200, %s203
      %p209 = scmp.eq.s32.totalorder %s17, 0
      %p210 = por %p208, %p209
      %p211 = scmp.ne.s32.totalorder %s200, %s203
      %p212 = scmp.eq.s32.totalorder %s22, 1
      %p213 = por %p211, %p212
      %p214 = scmp.ne.s32.totalorder %s203, %s204
      %p215 = scmp.eq.s32.totalorder %s22, 0
      %p216 = por %p214, %p215
      %p217 = scmp.ne.s32.totalorder %s203, %s204
      %p218 = scmp.eq.s32.totalorder %s23, 1
      %p219 = por %p217, %p218
      %p221 = scmp.ne.s32.totalorder %s204, %s220
      %p222 = scmp.eq.s32.totalorder %s23, 0
      %p223 = por %p221, %p222
      %p224 = scmp.le.s32.totalorder 1, %s17
      %p225 = scmp.lt.s32.totalorder %s17, 3
      %p226 = pnand %p224, %p225
      %p227 = pneg %p226
      // Predicated region
      $region9: #{gap_junction_forward_batched.1} parent=5 // pred_check
        _
      $region10: #{gap_junction_forward_batched.1} parent=5 // pred_check_branch
        %229 = sbr.rel (%p226) target = $region12
      $region11: #{gap_junction_forward_batched.1} parent=5 // pred_region
        %s230 = ssub.s32 %s17, 1
        // Predicated region
        $region13: #{gap_junction_forward_batched.1} parent=11 // pred_check
          %p231 = pneg %p64
        $region14: #{gap_junction_forward_batched.1} parent=11 // pred_check_branch
          %233 = sbr.rel (%p231) target = $region16
        $region15: #{gap_junction_forward_batched.1} parent=11 // pred_region
          _
        $region16: #{gap_junction_forward_batched.1} parent=11 // pred_fallthru
          _
        // Predicated region
        $region17: #{gap_junction_forward_batched.1} parent=11 // pred_check
          %p234 = pneg %p85
        $region18: #{gap_junction_forward_batched.1} parent=11 // pred_check_branch
          %236 = sbr.rel (%p234) target = $region20
        $region19: #{gap_junction_forward_batched.1} parent=11 // pred_region
          _
        $region20: #{gap_junction_forward_batched.1} parent=11 // pred_fallthru
          _
        // Predicated region
        $region21: #{gap_junction_forward_batched.1} parent=11 // pred_check
          %p237 = pneg %p106
        $region22: #{gap_junction_forward_batched.1} parent=11 // pred_check_branch
          %239 = sbr.rel (%p237) target = $region24
        $region23: #{gap_junction_forward_batched.1} parent=11 // pred_region
          _
        $region24: #{gap_junction_forward_batched.1} parent=11 // pred_fallthru
          _
        // Predicated region
        $region25: #{gap_junction_forward_batched.1} parent=11 // pred_check
          %p240 = pneg %p127
        $region26: #{gap_junction_forward_batched.1} parent=11 // pred_check_branch
          %242 = sbr.rel (%p240) target = $region28
        $region27: #{gap_junction_forward_batched.1} parent=11 // pred_region
          _
        $region28: #{gap_junction_forward_batched.1} parent=11 // pred_fallthru
          _
        // Predicated region
        $region29: #{gap_junction_forward_batched.1} parent=11 // pred_check
          %p243 = pneg %p148
        $region30: #{gap_junction_forward_batched.1} parent=11 // pred_check_branch
          %245 = sbr.rel (%p243) target = $region32
        $region31: #{gap_junction_forward_batched.1} parent=11 // pred_region
          _
        $region32: #{gap_junction_forward_batched.1} parent=11 // pred_fallthru
          _
        // Predicated region
        $region33: #{gap_junction_forward_batched.1} parent=11 // pred_check
          %p246 = pneg %p169
        $region34: #{gap_junction_forward_batched.1} parent=11 // pred_check_branch
          %248 = sbr.rel (%p246) target = $region36
        $region35: #{gap_junction_forward_batched.1} parent=11 // pred_region
          _
        $region36: #{gap_junction_forward_batched.1} parent=11 // pred_fallthru
          _
        // Predicated region
        $region37: #{gap_junction_forward_batched.1} parent=11 // pred_check
          %p249 = pneg %p190
        $region38: #{gap_junction_forward_batched.1} parent=11 // pred_check_branch
          %251 = sbr.rel (%p249) target = $region40
        $region39: #{gap_junction_forward_batched.1} parent=11 // pred_region
          _
        $region40: #{gap_junction_forward_batched.1} parent=11 // pred_fallthru
          _
      $region12: #{gap_junction_forward_batched.1} parent=5 // pred_fallthru
        _
      %p252 = scmp.lt.s32.totalorder %s17, 2
      // Predicated region
      $region41: #{gap_junction_forward_batched.1} parent=5 // pred_check
        %p253 = pneg %p252
      $region42: #{gap_junction_forward_batched.1} parent=5 // pred_check_branch
        %255 = sbr.rel (%p253) target = $region44
      $region43: #{gap_junction_forward_batched.1} parent=5 // pred_region
        // Predicated region
        $region45: #{gap_junction_forward_batched.1} parent=43 // pred_check
          %p256 = pneg %p37
        $region46: #{gap_junction_forward_batched.1} parent=43 // pred_check_branch
          %258 = sbr.rel (%p256) target = $region48
        $region47: #{gap_junction_forward_batched.1} parent=43 // pred_region
          %s259 = smul.u32 4, %s17
          %p260 = scmp.lt.s32.totalorder %s259, 7
          %s261 = scalar_select %p260, %s259, 7
          %s262 = smul.addr %s261, 8
          %s263 = scalar_lea.vmem %s0, %s262
          %s264 = smul.u32 4, %s17
        $region48: #{gap_junction_forward_batched.1} parent=43 // pred_fallthru
          _
      $region44: #{gap_junction_forward_batched.1} parent=5 // pred_fallthru
        _
      %p265 = scmp.le.s32.totalorder 1, %s17
      %p266 = scmp.lt.s32.totalorder %s17, 3
      %p267 = pnand %p265, %p266
      %p268 = pneg %p267
      // Predicated region
      $region49: #{gap_junction_forward_batched.1} parent=5 // pred_check
        _
      $region50: #{gap_junction_forward_batched.1} parent=5 // pred_check_branch
        %270 = sbr.rel (%p267) target = $region52
      $region51: #{gap_junction_forward_batched.1} parent=5 // pred_region
        %s271 = ssub.s32 %s17, 1
        %s272 = smul.u32 4, %s22
        %p273 = scmp.lt.s32.totalorder %s272, 7
        %s274 = scalar_select %p273, %s272, 7
        %s275 = smul.addr %s274, 8
        %s276 = scalar_lea.vmem %s0, %s275
        %p277 = pneg %p43
        %p278 = pneg %p40
        %p279 = pneg %p64
        %p280 = pneg %p61
        %p281 = pneg %p85
        %p282 = pneg %p82
        %p283 = pneg %p106
        %p284 = pneg %p103
        %p285 = pneg %p127
        %p286 = pneg %p124
        %p287 = pneg %p148
        %p288 = pneg %p145
        %p289 = pneg %p169
        %p290 = pneg %p166
        %p291 = pneg %p190
        %p292 = pneg %p187
        %p293 = pneg %p216
        %p294 = pneg %p213
        %s295 = sand.u32 %s203, 1
        %s296 = scalar_lea.sflag [#allocation3], %s295
        %s297 = sand.u32 %s203, 1
        %s298 = smul.addr %s297, 32
        %s299 = scalar_lea.vmem [#allocation2], %s298
        %s300 = smul.u32 4, %s22
        %p301 = scmp.lt.s32.totalorder %s300, 7
        %s302 = scalar_select %p301, %s300, 7
        %s303 = smul.addr %s302, 8
        %s304 = scalar_lea.vmem %s0, %s303
        %s305 = smul.u32 4, %s22
        %s306 = smul.u32 4, %s22
        %v307 = vld [vmem:[%s304] sm:$0xff]
        %v308 = vld [vmem:[%s304 + $0x8] sm:$0xff]
        %v309 = vld [vmem:[%s304 + $0x10] sm:$0xff]
        %v310 = vld [vmem:[%s304 + $0x18] sm:$0xff]
        %v311 = vld [vmem:[%s4] sm:$0xff]
        %v312 = vld [vmem:[%s1] sm:$0xff]
        %v313 = vld [vmem:[%s1 + $0x8] sm:$0xff]
        %v314 = vld [vmem:[%s1 + $0x10] sm:$0xff]
        %v315 = vld [vmem:[%s1 + $0x18] sm:$0xff]
        %v316 = vld [vmem:[%s1 + $0x20] sm:$0xff]
        %v317 = vld [vmem:[%s1 + $0x28] sm:$0xff]
        %v318 = vld [vmem:[%s1 + $0x30] sm:$0xff]
        %v319 = vld [vmem:[%s1 + $0x38] sm:$0xff]
        %vm320 = vcmask 261120
        %v322 = vsel %vm320, %v307, 0
        %v325 = vsel %vm320, %v308, 0
        %v328 = vsel %vm320, %v309, 0
        %v331 = vsel %vm320, %v310, 0
        %333 = vmatpush.msra.mxu0 0.0
        %334 = vmatpush.msra.mxu0 0.0
        %335 = vmatpush.msra.mxu0 0.0
        %336 = vmatpush.msra.mxu0 0.0
        %337 = vmatpush.msra.mxu0 0.0
        %338 = vmatpush.msra.mxu0 0.0
        %339 = vmatpush.msra.mxu0 0.0
        %340 = vmatpush.msra.mxu0 0.0
        %341 = vmatpush.msra.mxu0 0.0
        %342 = vmatpush.msra.mxu0 0.0
        %343 = vmatpush.msra.mxu0 0.0
        %344 = vmatpush.msra.mxu0 0.0
        %345 = vmatpush.msra.mxu0 %v318
        %346 = vmatpush.msra.mxu0 %v316
        %347 = vmatpush.msra.mxu0 %v314
        %348 = vmatpush.msra.mxu0 %v312
        %349 = vmatmul.f32.gmra.mxu0 %v322
        %v350 = vpop.f32.mrf.mxu0
        %v351 = vadd.f32 0.0, %v350
        %352 = vmatmul.f32.gmra.mxu0 %v325
        %v353 = vpop.f32.mrf.mxu0
        %v354 = vadd.f32 0.0, %v353
        %355 = vmatmul.f32.gmra.mxu0 %v328
        %v356 = vpop.f32.mrf.mxu0
        %v357 = vadd.f32 0.0, %v356
        %358 = vmatmul.f32.gmra.mxu0 %v331
        %v359 = vpop.f32.mrf.mxu0
        %v360 = vadd.f32 0.0, %v359
        %361 = vdwg.mxu0
        %362 = vmatpush.msra.mxu0 0.0
        %363 = vmatpush.msra.mxu0 0.0
        %364 = vmatpush.msra.mxu0 0.0
        %365 = vmatpush.msra.mxu0 0.0
        %366 = vmatpush.msra.mxu0 0.0
        %367 = vmatpush.msra.mxu0 0.0
        %368 = vmatpush.msra.mxu0 0.0
        %369 = vmatpush.msra.mxu0 0.0
        %370 = vmatpush.msra.mxu0 0.0
        %371 = vmatpush.msra.mxu0 0.0
        %372 = vmatpush.msra.mxu0 0.0
        %373 = vmatpush.msra.mxu0 0.0
        %374 = vmatpush.msra.mxu0 %v319
        %375 = vmatpush.msra.mxu0 %v317
        %376 = vmatpush.msra.mxu0 %v315
        %377 = vmatpush.msra.mxu0 %v313
        %378 = vmatmul.f32.gmra.mxu0 %v322
        %v379 = vpop.f32.mrf.mxu0
        %v380 = vadd.f32 0.0, %v379
        %381 = vmatmul.f32.gmra.mxu0 %v325
        %v382 = vpop.f32.mrf.mxu0
        %v383 = vadd.f32 0.0, %v382
        %384 = vmatmul.f32.gmra.mxu0 %v328
        %v385 = vpop.f32.mrf.mxu0
        %v386 = vadd.f32 0.0, %v385
        %387 = vmatmul.f32.gmra.mxu0 %v331
        %v388 = vpop.f32.mrf.mxu0
        %v389 = vadd.f32 0.0, %v388
        %390 = vdwg.mxu0
        %v391 = vperm.slane %v311, 3
        %v392 = vadd.f32 %v380, %v391
        %v393 = vadd.f32 %v383, %v391
        %v394 = vadd.f32 %v386, %v391
        %v395 = vadd.f32 %v389, %v391
        %v396 = vld [vmem:[%s5] sm:$0xff]
        %v397 = vld [vmem:[%s5 + $0x8] sm:$0xff]
        %v398 = vld [vmem:[%s5 + $0x10] sm:$0xff]
        %v399 = vld [vmem:[%s5 + $0x18] sm:$0xff]
        %v400 = vld [vmem:[%s5 + $0x20] sm:$0xff]
        %v401 = vld [vmem:[%s5 + $0x28] sm:$0xff]
        %v402 = vld [vmem:[%s5 + $0x30] sm:$0xff]
        %v403 = vld [vmem:[%s5 + $0x38] sm:$0xff]
        %v404 = vld [vmem:[%s5 + $0x40] sm:$0xff]
        %v405 = vld [vmem:[%s5 + $0x48] sm:$0xff]
        %v406 = vld [vmem:[%s5 + $0x50] sm:$0xff]
        %v407 = vld [vmem:[%s5 + $0x58] sm:$0xff]
        %v408 = vld [vmem:[%s5 + $0x60] sm:$0xff]
        %v409 = vld [vmem:[%s5 + $0x68] sm:$0xff]
        %v410 = vld [vmem:[%s5 + $0x70] sm:$0xff]
        %v411 = vld [vmem:[%s5 + $0x78] sm:$0xff]
        %v412 = vld [vmem:[%s5 + $0x80] sm:$0xff]
        %v413 = vld [vmem:[%s5 + $0x88] sm:$0xff]
        %v414 = vld [vmem:[%s5 + $0x90] sm:$0xff]
        %v415 = vld [vmem:[%s5 + $0x98] sm:$0xff]
        %v416 = vld [vmem:[%s5 + $0xa0] sm:$0xff]
        %v417 = vld [vmem:[%s5 + $0xa8] sm:$0xff]
        %v418 = vld [vmem:[%s5 + $0xb0] sm:$0xff]
        %v419 = vld [vmem:[%s5 + $0xb8] sm:$0xff]
        %v420 = vld [vmem:[%s5 + $0xc0] sm:$0xff]
        %v421 = vld [vmem:[%s5 + $0xc8] sm:$0xff]
        %v422 = vld [vmem:[%s5 + $0xd0] sm:$0xff]
        %v423 = vld [vmem:[%s5 + $0xd8] sm:$0xff]
        %v424 = vld [vmem:[%s5 + $0xe0] sm:$0xff]
        %v425 = vld [vmem:[%s5 + $0xe8] sm:$0xff]
        %v426 = vld [vmem:[%s5 + $0xf0] sm:$0xff]
        %v427 = vld [vmem:[%s5 + $0xf8] sm:$0xff]
        %v428 = vld [vmem:[%s6] sm:$0xff]
        %v429 = vld [vmem:[%s6 + $0x8] sm:$0xff]
        %v430 = vld [vmem:[%s6 + $0x10] sm:$0xff]
        %v431 = vld [vmem:[%s6 + $0x18] sm:$0xff]
        %v432 = vld [vmem:[%s6 + $0x20] sm:$0xff]
        %v433 = vld [vmem:[%s6 + $0x28] sm:$0xff]
        %v434 = vld [vmem:[%s6 + $0x30] sm:$0xff]
        %v435 = vld [vmem:[%s6 + $0x38] sm:$0xff]
        %v436 = vld [vmem:[%s6 + $0x40] sm:$0xff]
        %v437 = vld [vmem:[%s6 + $0x48] sm:$0xff]
        %v438 = vld [vmem:[%s6 + $0x50] sm:$0xff]
        %v439 = vld [vmem:[%s6 + $0x58] sm:$0xff]
        %v440 = vld [vmem:[%s6 + $0x60] sm:$0xff]
        %v441 = vld [vmem:[%s6 + $0x68] sm:$0xff]
        %v442 = vld [vmem:[%s6 + $0x70] sm:$0xff]
        %v443 = vld [vmem:[%s6 + $0x78] sm:$0xff]
        %v444 = vld [vmem:[%s6 + $0x80] sm:$0xff]
        %v445 = vld [vmem:[%s6 + $0x88] sm:$0xff]
        %v446 = vld [vmem:[%s6 + $0x90] sm:$0xff]
        %v447 = vld [vmem:[%s6 + $0x98] sm:$0xff]
        %v448 = vld [vmem:[%s6 + $0xa0] sm:$0xff]
        %v449 = vld [vmem:[%s6 + $0xa8] sm:$0xff]
        %v450 = vld [vmem:[%s6 + $0xb0] sm:$0xff]
        %v451 = vld [vmem:[%s6 + $0xb8] sm:$0xff]
        %v452 = vld [vmem:[%s6 + $0xc0] sm:$0xff]
        %v453 = vld [vmem:[%s6 + $0xc8] sm:$0xff]
        %v454 = vld [vmem:[%s6 + $0xd0] sm:$0xff]
        %v455 = vld [vmem:[%s6 + $0xd8] sm:$0xff]
        %v456 = vld [vmem:[%s6 + $0xe0] sm:$0xff]
        %v457 = vld [vmem:[%s6 + $0xe8] sm:$0xff]
        %v458 = vld [vmem:[%s6 + $0xf0] sm:$0xff]
        %v459 = vld [vmem:[%s6 + $0xf8] sm:$0xff]
        %464 = vrot.lane.b32.xlu0 %v351, 64
        %v465 = vpop.permute.xlu0 %464
        %466 = vrot.lane.b32.xlu0 %v354, 64
        %v467 = vpop.permute.xlu0 %466
        %468 = vrot.lane.b32.xlu0 %v357, 64
        %v469 = vpop.permute.xlu0 %468
        %470 = vrot.lane.b32.xlu0 %v360, 64
        %v471 = vpop.permute.xlu0 %470
        %v477 = vsel %vm320, %v428, 0
        %v480 = vsel %vm320, %v429, 0
        %v483 = vsel %vm320, %v430, 0
        %v486 = vsel %vm320, %v431, 0
        %v489 = vsel %vm320, %v432, 0
        %v492 = vsel %vm320, %v433, 0
        %v495 = vsel %vm320, %v434, 0
        %v498 = vsel %vm320, %v435, 0
        %v501 = vsel %vm320, %v436, 0
        %v504 = vsel %vm320, %v437, 0
        %v507 = vsel %vm320, %v438, 0
        %v510 = vsel %vm320, %v439, 0
        %v513 = vsel %vm320, %v440, 0
        %v516 = vsel %vm320, %v441, 0
        %v519 = vsel %vm320, %v442, 0
        %v522 = vsel %vm320, %v443, 0
        %v525 = vsel %vm320, %v444, 0
        %v528 = vsel %vm320, %v445, 0
        %v531 = vsel %vm320, %v446, 0
        %v534 = vsel %vm320, %v447, 0
        %v537 = vsel %vm320, %v448, 0
        %v540 = vsel %vm320, %v449, 0
        %v543 = vsel %vm320, %v450, 0
        %v546 = vsel %vm320, %v451, 0
        %v549 = vsel %vm320, %v452, 0
        %v552 = vsel %vm320, %v453, 0
        %v555 = vsel %vm320, %v454, 0
        %v558 = vsel %vm320, %v455, 0
        %v561 = vsel %vm320, %v456, 0
        %v564 = vsel %vm320, %v457, 0
        %v567 = vsel %vm320, %v458, 0
        %v570 = vsel %vm320, %v459, 0
        %572 = vmatpush.msra.mxu0 0.0
        %573 = vmatpush.msra.mxu0 0.0
        %574 = vmatpush.msra.mxu0 0.0
        %575 = vmatpush.msra.mxu0 0.0
        %576 = vmatpush.msra.mxu0 0.0
        %577 = vmatpush.msra.mxu0 0.0
        %578 = vmatpush.msra.mxu0 0.0
        %579 = vmatpush.msra.mxu0 0.0
        %580 = vmatpush.msra.mxu0 0.0
        %581 = vmatpush.msra.mxu0 0.0
        %582 = vmatpush.msra.mxu0 0.0
        %583 = vmatpush.msra.mxu0 0.0
        %584 = vmatpush.msra.mxu0 %v471
        %585 = vmatpush.msra.mxu0 %v469
        %586 = vmatpush.msra.mxu0 %v467
        %587 = vmatpush.msra.mxu0 %v465
        %588 = vmatmul.f32.gmra.mxu0 %v477
        %v589 = vpop.f32.mrf.mxu0
        %v590 = vadd.f32 0.0, %v589
        %591 = vmatmul.f32.gmra.mxu0 %v480
        %v592 = vpop.f32.mrf.mxu0
        %v593 = vadd.f32 0.0, %v592
        %594 = vmatmul.f32.gmra.mxu0 %v483
        %v595 = vpop.f32.mrf.mxu0
        %v596 = vadd.f32 0.0, %v595
        %597 = vmatmul.f32.gmra.mxu0 %v486
        %v598 = vpop.f32.mrf.mxu0
        %v599 = vadd.f32 0.0, %v598
        %600 = vmatmul.f32.gmra.mxu0 %v489
        %v601 = vpop.f32.mrf.mxu0
        %v602 = vadd.f32 0.0, %v601
        %603 = vmatmul.f32.gmra.mxu0 %v492
        %v604 = vpop.f32.mrf.mxu0
        %v605 = vadd.f32 0.0, %v604
        %606 = vmatmul.f32.gmra.mxu0 %v495
        %v607 = vpop.f32.mrf.mxu0
        %v608 = vadd.f32 0.0, %v607
        %609 = vmatmul.f32.gmra.mxu0 %v498
        %v610 = vpop.f32.mrf.mxu0
        %v611 = vadd.f32 0.0, %v610
        %612 = vmatmul.f32.gmra.mxu0 %v501
        %v613 = vpop.f32.mrf.mxu0
        %v614 = vadd.f32 0.0, %v613
        %615 = vmatmul.f32.gmra.mxu0 %v504
        %v616 = vpop.f32.mrf.mxu0
        %v617 = vadd.f32 0.0, %v616
        %618 = vmatmul.f32.gmra.mxu0 %v507
        %v619 = vpop.f32.mrf.mxu0
        %v620 = vadd.f32 0.0, %v619
        %621 = vmatmul.f32.gmra.mxu0 %v510
        %v622 = vpop.f32.mrf.mxu0
        %v623 = vadd.f32 0.0, %v622
        %624 = vmatmul.f32.gmra.mxu0 %v513
        %v625 = vpop.f32.mrf.mxu0
        %v626 = vadd.f32 0.0, %v625
        %627 = vmatmul.f32.gmra.mxu0 %v516
        %v628 = vpop.f32.mrf.mxu0
        %v629 = vadd.f32 0.0, %v628
        %630 = vmatmul.f32.gmra.mxu0 %v519
        %v631 = vpop.f32.mrf.mxu0
        %v632 = vadd.f32 0.0, %v631
        %633 = vmatmul.f32.gmra.mxu0 %v522
        %v634 = vpop.f32.mrf.mxu0
        %v635 = vadd.f32 0.0, %v634
        %636 = vmatmul.f32.gmra.mxu0 %v525
        %v637 = vpop.f32.mrf.mxu0
        %v638 = vadd.f32 0.0, %v637
        %639 = vmatmul.f32.gmra.mxu0 %v528
        %v640 = vpop.f32.mrf.mxu0
        %v641 = vadd.f32 0.0, %v640
        %642 = vmatmul.f32.gmra.mxu0 %v531
        %v643 = vpop.f32.mrf.mxu0
        %v644 = vadd.f32 0.0, %v643
        %645 = vmatmul.f32.gmra.mxu0 %v534
        %v646 = vpop.f32.mrf.mxu0
        %v647 = vadd.f32 0.0, %v646
        %648 = vmatmul.f32.gmra.mxu0 %v537
        %v649 = vpop.f32.mrf.mxu0
        %v650 = vadd.f32 0.0, %v649
        %651 = vmatmul.f32.gmra.mxu0 %v540
        %v652 = vpop.f32.mrf.mxu0
        %v653 = vadd.f32 0.0, %v652
        %654 = vmatmul.f32.gmra.mxu0 %v543
        %v655 = vpop.f32.mrf.mxu0
        %v656 = vadd.f32 0.0, %v655
        %657 = vmatmul.f32.gmra.mxu0 %v546
        %v658 = vpop.f32.mrf.mxu0
        %v659 = vadd.f32 0.0, %v658
        %660 = vmatmul.f32.gmra.mxu0 %v549
        %v661 = vpop.f32.mrf.mxu0
        %v662 = vadd.f32 0.0, %v661
        %663 = vmatmul.f32.gmra.mxu0 %v552
        %v664 = vpop.f32.mrf.mxu0
        %v665 = vadd.f32 0.0, %v664
        %666 = vmatmul.f32.gmra.mxu0 %v555
        %v667 = vpop.f32.mrf.mxu0
        %v668 = vadd.f32 0.0, %v667
        %669 = vmatmul.f32.gmra.mxu0 %v558
        %v670 = vpop.f32.mrf.mxu0
        %v671 = vadd.f32 0.0, %v670
        %672 = vmatmul.f32.gmra.mxu0 %v561
        %v673 = vpop.f32.mrf.mxu0
        %v674 = vadd.f32 0.0, %v673
        %675 = vmatmul.f32.gmra.mxu0 %v564
        %v676 = vpop.f32.mrf.mxu0
        %v677 = vadd.f32 0.0, %v676
        %678 = vmatmul.f32.gmra.mxu0 %v567
        %v679 = vpop.f32.mrf.mxu0
        %v680 = vadd.f32 0.0, %v679
        %681 = vmatmul.f32.gmra.mxu0 %v570
        %v682 = vpop.f32.mrf.mxu0
        %v683 = vadd.f32 0.0, %v682
        %684 = vdwg.mxu0
        %v686 = vsel %vm320, %v396, 0
        %v689 = vsel %vm320, %v397, 0
        %v692 = vsel %vm320, %v398, 0
        %v695 = vsel %vm320, %v399, 0
        %v698 = vsel %vm320, %v400, 0
        %v701 = vsel %vm320, %v401, 0
        %v704 = vsel %vm320, %v402, 0
        %v707 = vsel %vm320, %v403, 0
        %v710 = vsel %vm320, %v404, 0
        %v713 = vsel %vm320, %v405, 0
        %v716 = vsel %vm320, %v406, 0
        %v719 = vsel %vm320, %v407, 0
        %v722 = vsel %vm320, %v408, 0
        %v725 = vsel %vm320, %v409, 0
        %v728 = vsel %vm320, %v410, 0
        %v731 = vsel %vm320, %v411, 0
        %v734 = vsel %vm320, %v412, 0
        %v737 = vsel %vm320, %v413, 0
        %v740 = vsel %vm320, %v414, 0
        %v743 = vsel %vm320, %v415, 0
        %v746 = vsel %vm320, %v416, 0
        %v749 = vsel %vm320, %v417, 0
        %v752 = vsel %vm320, %v418, 0
        %v755 = vsel %vm320, %v419, 0
        %v758 = vsel %vm320, %v420, 0
        %v761 = vsel %vm320, %v421, 0
        %v764 = vsel %vm320, %v422, 0
        %v767 = vsel %vm320, %v423, 0
        %v770 = vsel %vm320, %v424, 0
        %v773 = vsel %vm320, %v425, 0
        %v776 = vsel %vm320, %v426, 0
        %v779 = vsel %vm320, %v427, 0
        %781 = vmatpush.msra.mxu0 0.0
        %782 = vmatpush.msra.mxu0 0.0
        %783 = vmatpush.msra.mxu0 0.0
        %784 = vmatpush.msra.mxu0 0.0
        %785 = vmatpush.msra.mxu0 0.0
        %786 = vmatpush.msra.mxu0 0.0
        %787 = vmatpush.msra.mxu0 0.0
        %788 = vmatpush.msra.mxu0 0.0
        %789 = vmatpush.msra.mxu0 0.0
        %790 = vmatpush.msra.mxu0 0.0
        %791 = vmatpush.msra.mxu0 0.0
        %792 = vmatpush.msra.mxu0 0.0
        %793 = vmatpush.msra.mxu0 %v360
        %794 = vmatpush.msra.mxu0 %v357
        %795 = vmatpush.msra.mxu0 %v354
        %796 = vmatpush.msra.mxu0 %v351
        %797 = vmatmul.f32.gmra.mxu0 %v686
        %v798 = vpop.f32.mrf.mxu0
        %v799 = vadd.f32 %v590, %v798
        %800 = vmatmul.f32.gmra.mxu0 %v689
        %v801 = vpop.f32.mrf.mxu0
        %v802 = vadd.f32 %v593, %v801
        %803 = vmatmul.f32.gmra.mxu0 %v692
        %v804 = vpop.f32.mrf.mxu0
        %v805 = vadd.f32 %v596, %v804
        %806 = vmatmul.f32.gmra.mxu0 %v695
        %v807 = vpop.f32.mrf.mxu0
        %v808 = vadd.f32 %v599, %v807
        %809 = vmatmul.f32.gmra.mxu0 %v698
        %v810 = vpop.f32.mrf.mxu0
        %v811 = vadd.f32 %v602, %v810
        %812 = vmatmul.f32.gmra.mxu0 %v701
        %v813 = vpop.f32.mrf.mxu0
        %v814 = vadd.f32 %v605, %v813
        %815 = vmatmul.f32.gmra.mxu0 %v704
        %v816 = vpop.f32.mrf.mxu0
        %v817 = vadd.f32 %v608, %v816
        %818 = vmatmul.f32.gmra.mxu0 %v707
        %v819 = vpop.f32.mrf.mxu0
        %v820 = vadd.f32 %v611, %v819
        %821 = vmatmul.f32.gmra.mxu0 %v710
        %v822 = vpop.f32.mrf.mxu0
        %v823 = vadd.f32 %v614, %v822
        %824 = vmatmul.f32.gmra.mxu0 %v713
        %v825 = vpop.f32.mrf.mxu0
        %v826 = vadd.f32 %v617, %v825
        %827 = vmatmul.f32.gmra.mxu0 %v716
        %v828 = vpop.f32.mrf.mxu0
        %v829 = vadd.f32 %v620, %v828
        %830 = vmatmul.f32.gmra.mxu0 %v719
        %v831 = vpop.f32.mrf.mxu0
        %v832 = vadd.f32 %v623, %v831
        %833 = vmatmul.f32.gmra.mxu0 %v722
        %v834 = vpop.f32.mrf.mxu0
        %v835 = vadd.f32 %v626, %v834
        %836 = vmatmul.f32.gmra.mxu0 %v725
        %v837 = vpop.f32.mrf.mxu0
        %v838 = vadd.f32 %v629, %v837
        %839 = vmatmul.f32.gmra.mxu0 %v728
        %v840 = vpop.f32.mrf.mxu0
        %v841 = vadd.f32 %v632, %v840
        %842 = vmatmul.f32.gmra.mxu0 %v731
        %v843 = vpop.f32.mrf.mxu0
        %v844 = vadd.f32 %v635, %v843
        %845 = vmatmul.f32.gmra.mxu0 %v734
        %v846 = vpop.f32.mrf.mxu0
        %v847 = vadd.f32 %v638, %v846
        %848 = vmatmul.f32.gmra.mxu0 %v737
        %v849 = vpop.f32.mrf.mxu0
        %v850 = vadd.f32 %v641, %v849
        %851 = vmatmul.f32.gmra.mxu0 %v740
        %v852 = vpop.f32.mrf.mxu0
        %v853 = vadd.f32 %v644, %v852
        %854 = vmatmul.f32.gmra.mxu0 %v743
        %v855 = vpop.f32.mrf.mxu0
        %v856 = vadd.f32 %v647, %v855
        %857 = vmatmul.f32.gmra.mxu0 %v746
        %v858 = vpop.f32.mrf.mxu0
        %v859 = vadd.f32 %v650, %v858
        %860 = vmatmul.f32.gmra.mxu0 %v749
        %v861 = vpop.f32.mrf.mxu0
        %v862 = vadd.f32 %v653, %v861
        %863 = vmatmul.f32.gmra.mxu0 %v752
        %v864 = vpop.f32.mrf.mxu0
        %v865 = vadd.f32 %v656, %v864
        %866 = vmatmul.f32.gmra.mxu0 %v755
        %v867 = vpop.f32.mrf.mxu0
        %v868 = vadd.f32 %v659, %v867
        %869 = vmatmul.f32.gmra.mxu0 %v758
        %v870 = vpop.f32.mrf.mxu0
        %v871 = vadd.f32 %v662, %v870
        %872 = vmatmul.f32.gmra.mxu0 %v761
        %v873 = vpop.f32.mrf.mxu0
        %v874 = vadd.f32 %v665, %v873
        %875 = vmatmul.f32.gmra.mxu0 %v764
        %v876 = vpop.f32.mrf.mxu0
        %v877 = vadd.f32 %v668, %v876
        %878 = vmatmul.f32.gmra.mxu0 %v767
        %v879 = vpop.f32.mrf.mxu0
        %v880 = vadd.f32 %v671, %v879
        %881 = vmatmul.f32.gmra.mxu0 %v770
        %v882 = vpop.f32.mrf.mxu0
        %v883 = vadd.f32 %v674, %v882
        %884 = vmatmul.f32.gmra.mxu0 %v773
        %v885 = vpop.f32.mrf.mxu0
        %v886 = vadd.f32 %v677, %v885
        %887 = vmatmul.f32.gmra.mxu0 %v776
        %v888 = vpop.f32.mrf.mxu0
        %v889 = vadd.f32 %v680, %v888
        %890 = vmatmul.f32.gmra.mxu0 %v779
        %v891 = vpop.f32.mrf.mxu0
        %v892 = vadd.f32 %v683, %v891
        %893 = vdwg.mxu0
        %v894 = vperm.slane %v311, 0
        %v895 = vadd.f32 %v799, %v894
        %v896 = vadd.f32 %v802, %v894
        %v897 = vadd.f32 %v805, %v894
        %v898 = vadd.f32 %v808, %v894
        %v899 = vadd.f32 %v811, %v894
        %v900 = vadd.f32 %v814, %v894
        %v901 = vadd.f32 %v817, %v894
        %v902 = vadd.f32 %v820, %v894
        %v903 = vadd.f32 %v823, %v894
        %v904 = vadd.f32 %v826, %v894
        %v905 = vadd.f32 %v829, %v894
        %v906 = vadd.f32 %v832, %v894
        %v907 = vadd.f32 %v835, %v894
        %v908 = vadd.f32 %v838, %v894
        %v909 = vadd.f32 %v841, %v894
        %v910 = vadd.f32 %v844, %v894
        %v911 = vadd.f32 %v847, %v894
        %v912 = vadd.f32 %v850, %v894
        %v913 = vadd.f32 %v853, %v894
        %v914 = vadd.f32 %v856, %v894
        %v915 = vadd.f32 %v859, %v894
        %v916 = vadd.f32 %v862, %v894
        %v917 = vadd.f32 %v865, %v894
        %v918 = vadd.f32 %v868, %v894
        %v919 = vadd.f32 %v871, %v894
        %v920 = vadd.f32 %v874, %v894
        %v921 = vadd.f32 %v877, %v894
        %v922 = vadd.f32 %v880, %v894
        %v923 = vadd.f32 %v883, %v894
        %v924 = vadd.f32 %v886, %v894
        %v925 = vadd.f32 %v889, %v894
        %v926 = vadd.f32 %v892, %v894
        %v927 = vmax.f32 %v895, 0.0
        %v928 = vmax.f32 %v896, 0.0
        %v929 = vmax.f32 %v897, 0.0
        %v930 = vmax.f32 %v898, 0.0
        %v931 = vmax.f32 %v899, 0.0
        %v932 = vmax.f32 %v900, 0.0
        %v933 = vmax.f32 %v901, 0.0
        %v934 = vmax.f32 %v902, 0.0
        %v935 = vmax.f32 %v903, 0.0
        %v936 = vmax.f32 %v904, 0.0
        %v937 = vmax.f32 %v905, 0.0
        %v938 = vmax.f32 %v906, 0.0
        %v939 = vmax.f32 %v907, 0.0
        %v940 = vmax.f32 %v908, 0.0
        %v941 = vmax.f32 %v909, 0.0
        %v942 = vmax.f32 %v910, 0.0
        %v943 = vmax.f32 %v911, 0.0
        %v944 = vmax.f32 %v912, 0.0
        %v945 = vmax.f32 %v913, 0.0
        %v946 = vmax.f32 %v914, 0.0
        %v947 = vmax.f32 %v915, 0.0
        %v948 = vmax.f32 %v916, 0.0
        %v949 = vmax.f32 %v917, 0.0
        %v950 = vmax.f32 %v918, 0.0
        %v951 = vmax.f32 %v919, 0.0
        %v952 = vmax.f32 %v920, 0.0
        %v953 = vmax.f32 %v921, 0.0
        %v954 = vmax.f32 %v922, 0.0
        %v955 = vmax.f32 %v923, 0.0
        %v956 = vmax.f32 %v924, 0.0
        %v957 = vmax.f32 %v925, 0.0
        %v958 = vmax.f32 %v926, 0.0
        %v959 = vld [vmem:[%s2] sm:$0xff]
        %v960 = vld [vmem:[%s2 + $0x8] sm:$0xff]
        %v961 = vld [vmem:[%s2 + $0x10] sm:$0xff]
        %v962 = vld [vmem:[%s2 + $0x18] sm:$0xff]
        %v963 = vld [vmem:[%s2 + $0x20] sm:$0xff]
        %v964 = vld [vmem:[%s2 + $0x28] sm:$0xff]
        %v965 = vld [vmem:[%s2 + $0x30] sm:$0xff]
        %v966 = vld [vmem:[%s2 + $0x38] sm:$0xff]
        %v967 = vperm.slane %v311, 1
        %vm968 = vcmask 523264
        %v970 = vsel %vm968, %v927, 0
        %v973 = vsel %vm968, %v928, 0
        %v976 = vsel %vm968, %v929, 0
        %v979 = vsel %vm968, %v930, 0
        %v982 = vsel %vm968, %v931, 0
        %v985 = vsel %vm968, %v932, 0
        %v988 = vsel %vm968, %v933, 0
        %v991 = vsel %vm968, %v934, 0
        %v994 = vsel %vm968, %v935, 0
        %v997 = vsel %vm968, %v936, 0
        %v1000 = vsel %vm968, %v937, 0
        %v1003 = vsel %vm968, %v938, 0
        %v1006 = vsel %vm968, %v939, 0
        %v1009 = vsel %vm968, %v940, 0
        %v1012 = vsel %vm968, %v941, 0
        %v1015 = vsel %vm968, %v942, 0
        %v1018 = vsel %vm968, %v943, 0
        %v1021 = vsel %vm968, %v944, 0
        %v1024 = vsel %vm968, %v945, 0
        %v1027 = vsel %vm968, %v946, 0
        %v1030 = vsel %vm968, %v947, 0
        %v1033 = vsel %vm968, %v948, 0
        %v1036 = vsel %vm968, %v949, 0
        %v1039 = vsel %vm968, %v950, 0
        %v1042 = vsel %vm968, %v951, 0
        %v1045 = vsel %vm968, %v952, 0
        %v1048 = vsel %vm968, %v953, 0
        %v1051 = vsel %vm968, %v954, 0
        %v1054 = vsel %vm968, %v955, 0
        %v1057 = vsel %vm968, %v956, 0
        %v1060 = vsel %vm968, %v957, 0
        %v1063 = vsel %vm968, %v958, 0
        %1065 = vmatpush.msra.mxu0 0.0
        %1066 = vmatpush.msra.mxu0 0.0
        %1067 = vmatpush.msra.mxu0 0.0
        %1068 = vmatpush.msra.mxu0 0.0
        %1069 = vmatpush.msra.mxu0 0.0
        %1070 = vmatpush.msra.mxu0 0.0
        %1071 = vmatpush.msra.mxu0 0.0
        %1072 = vmatpush.msra.mxu0 0.0
        %1073 = vmatpush.msra.mxu0 %v966
        %1074 = vmatpush.msra.mxu0 %v965
        %1075 = vmatpush.msra.mxu0 %v964
        %1076 = vmatpush.msra.mxu0 %v963
        %1077 = vmatpush.msra.mxu0 %v962
        %1078 = vmatpush.msra.mxu0 %v961
        %1079 = vmatpush.msra.mxu0 %v960
        %1080 = vmatpush.msra.mxu0 %v959
        %1081 = vmatmul.f32.gmra.mxu0 %v970
        %v1082 = vpop.f32.mrf.mxu0
        %v1083 = vadd.f32 %v967, %v1082
        %1084 = vmatmul.f32.gmra.mxu0 %v973
        %v1085 = vpop.f32.mrf.mxu0
        %v1086 = vadd.f32 %v967, %v1085
        %1087 = vmatmul.f32.gmra.mxu0 %v976
        %v1088 = vpop.f32.mrf.mxu0
        %v1089 = vadd.f32 %v967, %v1088
        %1090 = vmatmul.f32.gmra.mxu0 %v979
        %v1091 = vpop.f32.mrf.mxu0
        %v1092 = vadd.f32 %v967, %v1091
        %1093 = vmatmul.f32.gmra.mxu0 %v982
        %v1094 = vpop.f32.mrf.mxu0
        %v1095 = vadd.f32 %v967, %v1094
        %1096 = vmatmul.f32.gmra.mxu0 %v985
        %v1097 = vpop.f32.mrf.mxu0
        %v1098 = vadd.f32 %v967, %v1097
        %1099 = vmatmul.f32.gmra.mxu0 %v988
        %v1100 = vpop.f32.mrf.mxu0
        %v1101 = vadd.f32 %v967, %v1100
        %1102 = vmatmul.f32.gmra.mxu0 %v991
        %v1103 = vpop.f32.mrf.mxu0
        %v1104 = vadd.f32 %v967, %v1103
        %1105 = vmatmul.f32.gmra.mxu0 %v994
        %v1106 = vpop.f32.mrf.mxu0
        %v1107 = vadd.f32 %v967, %v1106
        %1108 = vmatmul.f32.gmra.mxu0 %v997
        %v1109 = vpop.f32.mrf.mxu0
        %v1110 = vadd.f32 %v967, %v1109
        %1111 = vmatmul.f32.gmra.mxu0 %v1000
        %v1112 = vpop.f32.mrf.mxu0
        %v1113 = vadd.f32 %v967, %v1112
        %1114 = vmatmul.f32.gmra.mxu0 %v1003
        %v1115 = vpop.f32.mrf.mxu0
        %v1116 = vadd.f32 %v967, %v1115
        %1117 = vmatmul.f32.gmra.mxu0 %v1006
        %v1118 = vpop.f32.mrf.mxu0
        %v1119 = vadd.f32 %v967, %v1118
        %1120 = vmatmul.f32.gmra.mxu0 %v1009
        %v1121 = vpop.f32.mrf.mxu0
        %v1122 = vadd.f32 %v967, %v1121
        %1123 = vmatmul.f32.gmra.mxu0 %v1012
        %v1124 = vpop.f32.mrf.mxu0
        %v1125 = vadd.f32 %v967, %v1124
        %1126 = vmatmul.f32.gmra.mxu0 %v1015
        %v1127 = vpop.f32.mrf.mxu0
        %v1128 = vadd.f32 %v967, %v1127
        %1129 = vmatmul.f32.gmra.mxu0 %v1018
        %v1130 = vpop.f32.mrf.mxu0
        %v1131 = vadd.f32 %v967, %v1130
        %1132 = vmatmul.f32.gmra.mxu0 %v1021
        %v1133 = vpop.f32.mrf.mxu0
        %v1134 = vadd.f32 %v967, %v1133
        %1135 = vmatmul.f32.gmra.mxu0 %v1024
        %v1136 = vpop.f32.mrf.mxu0
        %v1137 = vadd.f32 %v967, %v1136
        %1138 = vmatmul.f32.gmra.mxu0 %v1027
        %v1139 = vpop.f32.mrf.mxu0
        %v1140 = vadd.f32 %v967, %v1139
        %1141 = vmatmul.f32.gmra.mxu0 %v1030
        %v1142 = vpop.f32.mrf.mxu0
        %v1143 = vadd.f32 %v967, %v1142
        %1144 = vmatmul.f32.gmra.mxu0 %v1033
        %v1145 = vpop.f32.mrf.mxu0
        %v1146 = vadd.f32 %v967, %v1145
        %1147 = vmatmul.f32.gmra.mxu0 %v1036
        %v1148 = vpop.f32.mrf.mxu0
        %v1149 = vadd.f32 %v967, %v1148
        %1150 = vmatmul.f32.gmra.mxu0 %v1039
        %v1151 = vpop.f32.mrf.mxu0
        %v1152 = vadd.f32 %v967, %v1151
        %1153 = vmatmul.f32.gmra.mxu0 %v1042
        %v1154 = vpop.f32.mrf.mxu0
        %v1155 = vadd.f32 %v967, %v1154
        %1156 = vmatmul.f32.gmra.mxu0 %v1045
        %v1157 = vpop.f32.mrf.mxu0
        %v1158 = vadd.f32 %v967, %v1157
        %1159 = vmatmul.f32.gmra.mxu0 %v1048
        %v1160 = vpop.f32.mrf.mxu0
        %v1161 = vadd.f32 %v967, %v1160
        %1162 = vmatmul.f32.gmra.mxu0 %v1051
        %v1163 = vpop.f32.mrf.mxu0
        %v1164 = vadd.f32 %v967, %v1163
        %1165 = vmatmul.f32.gmra.mxu0 %v1054
        %v1166 = vpop.f32.mrf.mxu0
        %v1167 = vadd.f32 %v967, %v1166
        %1168 = vmatmul.f32.gmra.mxu0 %v1057
        %v1169 = vpop.f32.mrf.mxu0
        %v1170 = vadd.f32 %v967, %v1169
        %1171 = vmatmul.f32.gmra.mxu0 %v1060
        %v1172 = vpop.f32.mrf.mxu0
        %v1173 = vadd.f32 %v967, %v1172
        %1174 = vmatmul.f32.gmra.mxu0 %v1063
        %v1175 = vpop.f32.mrf.mxu0
        %v1176 = vadd.f32 %v967, %v1175
        %1177 = vdwg.mxu0
        %v1178 = vmax.f32 %v1083, 0.0
        %v1179 = vmax.f32 %v1086, 0.0
        %v1180 = vmax.f32 %v1089, 0.0
        %v1181 = vmax.f32 %v1092, 0.0
        %v1182 = vmax.f32 %v1095, 0.0
        %v1183 = vmax.f32 %v1098, 0.0
        %v1184 = vmax.f32 %v1101, 0.0
        %v1185 = vmax.f32 %v1104, 0.0
        %v1186 = vmax.f32 %v1107, 0.0
        %v1187 = vmax.f32 %v1110, 0.0
        %v1188 = vmax.f32 %v1113, 0.0
        %v1189 = vmax.f32 %v1116, 0.0
        %v1190 = vmax.f32 %v1119, 0.0
        %v1191 = vmax.f32 %v1122, 0.0
        %v1192 = vmax.f32 %v1125, 0.0
        %v1193 = vmax.f32 %v1128, 0.0
        %v1194 = vmax.f32 %v1131, 0.0
        %v1195 = vmax.f32 %v1134, 0.0
        %v1196 = vmax.f32 %v1137, 0.0
        %v1197 = vmax.f32 %v1140, 0.0
        %v1198 = vmax.f32 %v1143, 0.0
        %v1199 = vmax.f32 %v1146, 0.0
        %v1200 = vmax.f32 %v1149, 0.0
        %v1201 = vmax.f32 %v1152, 0.0
        %v1202 = vmax.f32 %v1155, 0.0
        %v1203 = vmax.f32 %v1158, 0.0
        %v1204 = vmax.f32 %v1161, 0.0
        %v1205 = vmax.f32 %v1164, 0.0
        %v1206 = vmax.f32 %v1167, 0.0
        %v1207 = vmax.f32 %v1170, 0.0
        %v1208 = vmax.f32 %v1173, 0.0
        %v1209 = vmax.f32 %v1176, 0.0
        %v1210 = vld [vmem:[%s3] sm:$0xff]
        %v1211 = vld [vmem:[%s3 + $0x8] sm:$0xff]
        %v1212 = vld [vmem:[%s3 + $0x10] sm:$0xff]
        %v1213 = vld [vmem:[%s3 + $0x18] sm:$0xff]
        %v1214 = vld [vmem:[%s3 + $0x20] sm:$0xff]
        %v1215 = vld [vmem:[%s3 + $0x28] sm:$0xff]
        %v1216 = vld [vmem:[%s3 + $0x30] sm:$0xff]
        %v1217 = vld [vmem:[%s3 + $0x38] sm:$0xff]
        %v1218 = vld [vmem:[%s3 + $0x40] sm:$0xff]
        %v1219 = vld [vmem:[%s3 + $0x48] sm:$0xff]
        %v1220 = vld [vmem:[%s3 + $0x50] sm:$0xff]
        %v1221 = vld [vmem:[%s3 + $0x58] sm:$0xff]
        %v1222 = vld [vmem:[%s3 + $0x60] sm:$0xff]
        %v1223 = vld [vmem:[%s3 + $0x68] sm:$0xff]
        %v1224 = vld [vmem:[%s3 + $0x70] sm:$0xff]
        %v1225 = vld [vmem:[%s3 + $0x78] sm:$0xff]
        %v1226 = vperm.slane %v311, 2
        %1227 = vmatpush.msra.mxu0 %v1225
        %1228 = vmatpush.msra.mxu0 %v1224
        %1229 = vmatpush.msra.mxu0 %v1223
        %1230 = vmatpush.msra.mxu0 %v1222
        %1231 = vmatpush.msra.mxu0 %v1221
        %1232 = vmatpush.msra.mxu0 %v1220
        %1233 = vmatpush.msra.mxu0 %v1219
        %1234 = vmatpush.msra.mxu0 %v1218
        %1235 = vmatpush.msra.mxu0 %v1217
        %1236 = vmatpush.msra.mxu0 %v1216
        %1237 = vmatpush.msra.mxu0 %v1215
        %1238 = vmatpush.msra.mxu0 %v1214
        %1239 = vmatpush.msra.mxu0 %v1213
        %1240 = vmatpush.msra.mxu0 %v1212
        %1241 = vmatpush.msra.mxu0 %v1211
        %1242 = vmatpush.msra.mxu0 %v1210
        %1243 = vmatmul.f32.gmra.mxu0 %v1178
        %v1244 = vpop.f32.mrf.mxu0
        %v1245 = vadd.f32 %v1226, %v1244
        %1246 = vmatmul.f32.gmra.mxu0 %v1179
        %v1247 = vpop.f32.mrf.mxu0
        %v1248 = vadd.f32 %v1226, %v1247
        %1249 = vmatmul.f32.gmra.mxu0 %v1180
        %v1250 = vpop.f32.mrf.mxu0
        %v1251 = vadd.f32 %v1226, %v1250
        %1252 = vmatmul.f32.gmra.mxu0 %v1181
        %v1253 = vpop.f32.mrf.mxu0
        %v1254 = vadd.f32 %v1226, %v1253
        %1255 = vmatmul.f32.gmra.mxu0 %v1182
        %v1256 = vpop.f32.mrf.mxu0
        %v1257 = vadd.f32 %v1226, %v1256
        %1258 = vmatmul.f32.gmra.mxu0 %v1183
        %v1259 = vpop.f32.mrf.mxu0
        %v1260 = vadd.f32 %v1226, %v1259
        %1261 = vmatmul.f32.gmra.mxu0 %v1184
        %v1262 = vpop.f32.mrf.mxu0
        %v1263 = vadd.f32 %v1226, %v1262
        %1264 = vmatmul.f32.gmra.mxu0 %v1185
        %v1265 = vpop.f32.mrf.mxu0
        %v1266 = vadd.f32 %v1226, %v1265
        %1267 = vmatmul.f32.gmra.mxu0 %v1186
        %v1268 = vpop.f32.mrf.mxu0
        %v1269 = vadd.f32 %v1226, %v1268
        %1270 = vmatmul.f32.gmra.mxu0 %v1187
        %v1271 = vpop.f32.mrf.mxu0
        %v1272 = vadd.f32 %v1226, %v1271
        %1273 = vmatmul.f32.gmra.mxu0 %v1188
        %v1274 = vpop.f32.mrf.mxu0
        %v1275 = vadd.f32 %v1226, %v1274
        %1276 = vmatmul.f32.gmra.mxu0 %v1189
        %v1277 = vpop.f32.mrf.mxu0
        %v1278 = vadd.f32 %v1226, %v1277
        %1279 = vmatmul.f32.gmra.mxu0 %v1190
        %v1280 = vpop.f32.mrf.mxu0
        %v1281 = vadd.f32 %v1226, %v1280
        %1282 = vmatmul.f32.gmra.mxu0 %v1191
        %v1283 = vpop.f32.mrf.mxu0
        %v1284 = vadd.f32 %v1226, %v1283
        %1285 = vmatmul.f32.gmra.mxu0 %v1192
        %v1286 = vpop.f32.mrf.mxu0
        %v1287 = vadd.f32 %v1226, %v1286
        %1288 = vmatmul.f32.gmra.mxu0 %v1193
        %v1289 = vpop.f32.mrf.mxu0
        %v1290 = vadd.f32 %v1226, %v1289
        %1291 = vmatmul.f32.gmra.mxu0 %v1194
        %v1292 = vpop.f32.mrf.mxu0
        %v1293 = vadd.f32 %v1226, %v1292
        %1294 = vmatmul.f32.gmra.mxu0 %v1195
        %v1295 = vpop.f32.mrf.mxu0
        %v1296 = vadd.f32 %v1226, %v1295
        %1297 = vmatmul.f32.gmra.mxu0 %v1196
        %v1298 = vpop.f32.mrf.mxu0
        %v1299 = vadd.f32 %v1226, %v1298
        %1300 = vmatmul.f32.gmra.mxu0 %v1197
        %v1301 = vpop.f32.mrf.mxu0
        %v1302 = vadd.f32 %v1226, %v1301
        %1303 = vmatmul.f32.gmra.mxu0 %v1198
        %v1304 = vpop.f32.mrf.mxu0
        %v1305 = vadd.f32 %v1226, %v1304
        %1306 = vmatmul.f32.gmra.mxu0 %v1199
        %v1307 = vpop.f32.mrf.mxu0
        %v1308 = vadd.f32 %v1226, %v1307
        %1309 = vmatmul.f32.gmra.mxu0 %v1200
        %v1310 = vpop.f32.mrf.mxu0
        %v1311 = vadd.f32 %v1226, %v1310
        %1312 = vmatmul.f32.gmra.mxu0 %v1201
        %v1313 = vpop.f32.mrf.mxu0
        %v1314 = vadd.f32 %v1226, %v1313
        %1315 = vmatmul.f32.gmra.mxu0 %v1202
        %v1316 = vpop.f32.mrf.mxu0
        %v1317 = vadd.f32 %v1226, %v1316
        %1318 = vmatmul.f32.gmra.mxu0 %v1203
        %v1319 = vpop.f32.mrf.mxu0
        %v1320 = vadd.f32 %v1226, %v1319
        %1321 = vmatmul.f32.gmra.mxu0 %v1204
        %v1322 = vpop.f32.mrf.mxu0
        %v1323 = vadd.f32 %v1226, %v1322
        %1324 = vmatmul.f32.gmra.mxu0 %v1205
        %v1325 = vpop.f32.mrf.mxu0
        %v1326 = vadd.f32 %v1226, %v1325
        %1327 = vmatmul.f32.gmra.mxu0 %v1206
        %v1328 = vpop.f32.mrf.mxu0
        %v1329 = vadd.f32 %v1226, %v1328
        %1330 = vmatmul.f32.gmra.mxu0 %v1207
        %v1331 = vpop.f32.mrf.mxu0
        %v1332 = vadd.f32 %v1226, %v1331
        %1333 = vmatmul.f32.gmra.mxu0 %v1208
        %v1334 = vpop.f32.mrf.mxu0
        %v1335 = vadd.f32 %v1226, %v1334
        %1336 = vmatmul.f32.gmra.mxu0 %v1209
        %v1337 = vpop.f32.mrf.mxu0
        %v1338 = vadd.f32 %v1226, %v1337
        %1339 = vdwg.mxu0
        %v1340 = vsub.f32 0.0, %v1245
        %v1341 = vsub.f32 0.0, %v1248
        %v1342 = vsub.f32 0.0, %v1251
        %v1343 = vsub.f32 0.0, %v1254
        %v1344 = vsub.f32 0.0, %v1257
        %v1345 = vsub.f32 0.0, %v1260
        %v1346 = vsub.f32 0.0, %v1263
        %v1347 = vsub.f32 0.0, %v1266
        %v1348 = vsub.f32 0.0, %v1269
        %v1349 = vsub.f32 0.0, %v1272
        %v1350 = vsub.f32 0.0, %v1275
        %v1351 = vsub.f32 0.0, %v1278
        %v1352 = vsub.f32 0.0, %v1281
        %v1353 = vsub.f32 0.0, %v1284
        %v1354 = vsub.f32 0.0, %v1287
        %v1355 = vsub.f32 0.0, %v1290
        %v1356 = vsub.f32 0.0, %v1293
        %v1357 = vsub.f32 0.0, %v1296
        %v1358 = vsub.f32 0.0, %v1299
        %v1359 = vsub.f32 0.0, %v1302
        %v1360 = vsub.f32 0.0, %v1305
        %v1361 = vsub.f32 0.0, %v1308
        %v1362 = vsub.f32 0.0, %v1311
        %v1363 = vsub.f32 0.0, %v1314
        %v1364 = vsub.f32 0.0, %v1317
        %v1365 = vsub.f32 0.0, %v1320
        %v1366 = vsub.f32 0.0, %v1323
        %v1367 = vsub.f32 0.0, %v1326
        %v1368 = vsub.f32 0.0, %v1329
        %v1369 = vsub.f32 0.0, %v1332
        %v1370 = vsub.f32 0.0, %v1335
        %v1371 = vsub.f32 0.0, %v1338
        %v1372 = vmul.f32 %v1340, 1.442695
        %v1373 = vpow.pop %v1372
        %v1374 = vmul.f32 %v1341, 1.442695
        %v1375 = vpow.pop %v1374
        %v1376 = vmul.f32 %v1342, 1.442695
        %v1377 = vpow.pop %v1376
        %v1378 = vmul.f32 %v1343, 1.442695
        %v1379 = vpow.pop %v1378
        %v1380 = vmul.f32 %v1344, 1.442695
        %v1381 = vpow.pop %v1380
        %v1382 = vmul.f32 %v1345, 1.442695
        %v1383 = vpow.pop %v1382
        %v1384 = vmul.f32 %v1346, 1.442695
        %v1385 = vpow.pop %v1384
        %v1386 = vmul.f32 %v1347, 1.442695
        %v1387 = vpow.pop %v1386
        %v1388 = vmul.f32 %v1348, 1.442695
        %v1389 = vpow.pop %v1388
        %v1390 = vmul.f32 %v1349, 1.442695
        %v1391 = vpow.pop %v1390
        %v1392 = vmul.f32 %v1350, 1.442695
        %v1393 = vpow.pop %v1392
        %v1394 = vmul.f32 %v1351, 1.442695
        %v1395 = vpow.pop %v1394
        %v1396 = vmul.f32 %v1352, 1.442695
        %v1397 = vpow.pop %v1396
        %v1398 = vmul.f32 %v1353, 1.442695
        %v1399 = vpow.pop %v1398
        %v1400 = vmul.f32 %v1354, 1.442695
        %v1401 = vpow.pop %v1400
        %v1402 = vmul.f32 %v1355, 1.442695
        %v1403 = vpow.pop %v1402
        %v1404 = vmul.f32 %v1356, 1.442695
        %v1405 = vpow.pop %v1404
        %v1406 = vmul.f32 %v1357, 1.442695
        %v1407 = vpow.pop %v1406
        %v1408 = vmul.f32 %v1358, 1.442695
        %v1409 = vpow.pop %v1408
        %v1410 = vmul.f32 %v1359, 1.442695
        %v1411 = vpow.pop %v1410
        %v1412 = vmul.f32 %v1360, 1.442695
        %v1413 = vpow.pop %v1412
        %v1414 = vmul.f32 %v1361, 1.442695
        %v1415 = vpow.pop %v1414
        %v1416 = vmul.f32 %v1362, 1.442695
        %v1417 = vpow.pop %v1416
        %v1418 = vmul.f32 %v1363, 1.442695
        %v1419 = vpow.pop %v1418
        %v1420 = vmul.f32 %v1364, 1.442695
        %v1421 = vpow.pop %v1420
        %v1422 = vmul.f32 %v1365, 1.442695
        %v1423 = vpow.pop %v1422
        %v1424 = vmul.f32 %v1366, 1.442695
        %v1425 = vpow.pop %v1424
        %v1426 = vmul.f32 %v1367, 1.442695
        %v1427 = vpow.pop %v1426
        %v1428 = vmul.f32 %v1368, 1.442695
        %v1429 = vpow.pop %v1428
        %v1430 = vmul.f32 %v1369, 1.442695
        %v1431 = vpow.pop %v1430
        %v1432 = vmul.f32 %v1370, 1.442695
        %v1433 = vpow.pop %v1432
        %v1434 = vmul.f32 %v1371, 1.442695
        %v1435 = vpow.pop %v1434
        %v1436 = vadd.f32 %v1373, 1.0
        %v1437 = vadd.f32 %v1375, 1.0
        %v1438 = vadd.f32 %v1377, 1.0
        %v1439 = vadd.f32 %v1379, 1.0
        %v1440 = vadd.f32 %v1381, 1.0
        %v1441 = vadd.f32 %v1383, 1.0
        %v1442 = vadd.f32 %v1385, 1.0
        %v1443 = vadd.f32 %v1387, 1.0
        %v1444 = vadd.f32 %v1389, 1.0
        %v1445 = vadd.f32 %v1391, 1.0
        %v1446 = vadd.f32 %v1393, 1.0
        %v1447 = vadd.f32 %v1395, 1.0
        %v1448 = vadd.f32 %v1397, 1.0
        %v1449 = vadd.f32 %v1399, 1.0
        %v1450 = vadd.f32 %v1401, 1.0
        %v1451 = vadd.f32 %v1403, 1.0
        %v1452 = vadd.f32 %v1405, 1.0
        %v1453 = vadd.f32 %v1407, 1.0
        %v1454 = vadd.f32 %v1409, 1.0
        %v1455 = vadd.f32 %v1411, 1.0
        %v1456 = vadd.f32 %v1413, 1.0
        %v1457 = vadd.f32 %v1415, 1.0
        %v1458 = vadd.f32 %v1417, 1.0
        %v1459 = vadd.f32 %v1419, 1.0
        %v1460 = vadd.f32 %v1421, 1.0
        %v1461 = vadd.f32 %v1423, 1.0
        %v1462 = vadd.f32 %v1425, 1.0
        %v1463 = vadd.f32 %v1427, 1.0
        %v1464 = vadd.f32 %v1429, 1.0
        %v1465 = vadd.f32 %v1431, 1.0
        %v1466 = vadd.f32 %v1433, 1.0
        %v1467 = vadd.f32 %v1435, 1.0
        %v1468 = vrcp.pop %v1436
        %v1469 = vrcp.pop %v1437
        %v1470 = vrcp.pop %v1438
        %v1471 = vrcp.pop %v1439
        %v1472 = vrcp.pop %v1440
        %v1473 = vrcp.pop %v1441
        %v1474 = vrcp.pop %v1442
        %v1475 = vrcp.pop %v1443
        %v1476 = vrcp.pop %v1444
        %v1477 = vrcp.pop %v1445
        %v1478 = vrcp.pop %v1446
        %v1479 = vrcp.pop %v1447
        %v1480 = vrcp.pop %v1448
        %v1481 = vrcp.pop %v1449
        %v1482 = vrcp.pop %v1450
        %v1483 = vrcp.pop %v1451
        %v1484 = vrcp.pop %v1452
        %v1485 = vrcp.pop %v1453
        %v1486 = vrcp.pop %v1454
        %v1487 = vrcp.pop %v1455
        %v1488 = vrcp.pop %v1456
        %v1489 = vrcp.pop %v1457
        %v1490 = vrcp.pop %v1458
        %v1491 = vrcp.pop %v1459
        %v1492 = vrcp.pop %v1460
        %v1493 = vrcp.pop %v1461
        %v1494 = vrcp.pop %v1462
        %v1495 = vrcp.pop %v1463
        %v1496 = vrcp.pop %v1464
        %v1497 = vrcp.pop %v1465
        %v1498 = vrcp.pop %v1466
        %v1499 = vrcp.pop %v1467
        %v1500 = vld [vmem:[%s7] sm:$0xff]
        %v1501 = vld [vmem:[%s7 + $0x8] sm:$0xff]
        %v1502 = vld [vmem:[%s7 + $0x10] sm:$0xff]
        %v1503 = vld [vmem:[%s7 + $0x18] sm:$0xff]
        %v1504 = vld [vmem:[%s7 + $0x20] sm:$0xff]
        %v1505 = vld [vmem:[%s7 + $0x28] sm:$0xff]
        %v1506 = vld [vmem:[%s7 + $0x30] sm:$0xff]
        %v1507 = vld [vmem:[%s7 + $0x38] sm:$0xff]
        %v1508 = vld [vmem:[%s7 + $0x40] sm:$0xff]
        %v1509 = vld [vmem:[%s7 + $0x48] sm:$0xff]
        %v1510 = vld [vmem:[%s7 + $0x50] sm:$0xff]
        %v1511 = vld [vmem:[%s7 + $0x58] sm:$0xff]
        %v1512 = vld [vmem:[%s7 + $0x60] sm:$0xff]
        %v1513 = vld [vmem:[%s7 + $0x68] sm:$0xff]
        %v1514 = vld [vmem:[%s7 + $0x70] sm:$0xff]
        %v1515 = vld [vmem:[%s7 + $0x78] sm:$0xff]
        %v1516 = vld [vmem:[%s7 + $0x80] sm:$0xff]
        %v1517 = vld [vmem:[%s7 + $0x88] sm:$0xff]
        %v1518 = vld [vmem:[%s7 + $0x90] sm:$0xff]
        %v1519 = vld [vmem:[%s7 + $0x98] sm:$0xff]
        %v1520 = vld [vmem:[%s7 + $0xa0] sm:$0xff]
        %v1521 = vld [vmem:[%s7 + $0xa8] sm:$0xff]
        %v1522 = vld [vmem:[%s7 + $0xb0] sm:$0xff]
        %v1523 = vld [vmem:[%s7 + $0xb8] sm:$0xff]
        %v1524 = vld [vmem:[%s7 + $0xc0] sm:$0xff]
        %v1525 = vld [vmem:[%s7 + $0xc8] sm:$0xff]
        %v1526 = vld [vmem:[%s7 + $0xd0] sm:$0xff]
        %v1527 = vld [vmem:[%s7 + $0xd8] sm:$0xff]
        %v1528 = vld [vmem:[%s7 + $0xe0] sm:$0xff]
        %v1529 = vld [vmem:[%s7 + $0xe8] sm:$0xff]
        %v1530 = vld [vmem:[%s7 + $0xf0] sm:$0xff]
        %v1531 = vld [vmem:[%s7 + $0xf8] sm:$0xff]
        %v1533 = vsel %vm320, %v1500, 0
        %v1536 = vsel %vm320, %v1501, 0
        %v1539 = vsel %vm320, %v1502, 0
        %v1542 = vsel %vm320, %v1503, 0
        %v1545 = vsel %vm320, %v1504, 0
        %v1548 = vsel %vm320, %v1505, 0
        %v1551 = vsel %vm320, %v1506, 0
        %v1554 = vsel %vm320, %v1507, 0
        %v1557 = vsel %vm320, %v1508, 0
        %v1560 = vsel %vm320, %v1509, 0
        %v1563 = vsel %vm320, %v1510, 0
        %v1566 = vsel %vm320, %v1511, 0
        %v1569 = vsel %vm320, %v1512, 0
        %v1572 = vsel %vm320, %v1513, 0
        %v1575 = vsel %vm320, %v1514, 0
        %v1578 = vsel %vm320, %v1515, 0
        %v1581 = vsel %vm320, %v1516, 0
        %v1584 = vsel %vm320, %v1517, 0
        %v1587 = vsel %vm320, %v1518, 0
        %v1590 = vsel %vm320, %v1519, 0
        %v1593 = vsel %vm320, %v1520, 0
        %v1596 = vsel %vm320, %v1521, 0
        %v1599 = vsel %vm320, %v1522, 0
        %v1602 = vsel %vm320, %v1523, 0
        %v1605 = vsel %vm320, %v1524, 0
        %v1608 = vsel %vm320, %v1525, 0
        %v1611 = vsel %vm320, %v1526, 0
        %v1614 = vsel %vm320, %v1527, 0
        %v1617 = vsel %vm320, %v1528, 0
        %v1620 = vsel %vm320, %v1529, 0
        %v1623 = vsel %vm320, %v1530, 0
        %v1626 = vsel %vm320, %v1531, 0
        %1628 = vmatpush.msra.mxu0 0.0
        %1629 = vmatpush.msra.mxu0 0.0
        %1630 = vmatpush.msra.mxu0 0.0
        %1631 = vmatpush.msra.mxu0 0.0
        %1632 = vmatpush.msra.mxu0 0.0
        %1633 = vmatpush.msra.mxu0 0.0
        %1634 = vmatpush.msra.mxu0 0.0
        %1635 = vmatpush.msra.mxu0 0.0
        %1636 = vmatpush.msra.mxu0 0.0
        %1637 = vmatpush.msra.mxu0 0.0
        %1638 = vmatpush.msra.mxu0 0.0
        %1639 = vmatpush.msra.mxu0 0.0
        %1640 = vmatpush.msra.mxu0 %v395
        %1641 = vmatpush.msra.mxu0 %v394
        %1642 = vmatpush.msra.mxu0 %v393
        %1643 = vmatpush.msra.mxu0 %v392
        %1644 = vmatmul.f32.gmra.mxu0 %v1533
        %v1645 = vpop.f32.mrf.mxu0
        %v1646 = vadd.f32 0.0, %v1645
        %1647 = vmatmul.f32.gmra.mxu0 %v1536
        %v1648 = vpop.f32.mrf.mxu0
        %v1649 = vadd.f32 0.0, %v1648
        %1650 = vmatmul.f32.gmra.mxu0 %v1539
        %v1651 = vpop.f32.mrf.mxu0
        %v1652 = vadd.f32 0.0, %v1651
        %1653 = vmatmul.f32.gmra.mxu0 %v1542
        %v1654 = vpop.f32.mrf.mxu0
        %v1655 = vadd.f32 0.0, %v1654
        %1656 = vmatmul.f32.gmra.mxu0 %v1545
        %v1657 = vpop.f32.mrf.mxu0
        %v1658 = vadd.f32 0.0, %v1657
        %1659 = vmatmul.f32.gmra.mxu0 %v1548
        %v1660 = vpop.f32.mrf.mxu0
        %v1661 = vadd.f32 0.0, %v1660
        %1662 = vmatmul.f32.gmra.mxu0 %v1551
        %v1663 = vpop.f32.mrf.mxu0
        %v1664 = vadd.f32 0.0, %v1663
        %1665 = vmatmul.f32.gmra.mxu0 %v1554
        %v1666 = vpop.f32.mrf.mxu0
        %v1667 = vadd.f32 0.0, %v1666
        %1668 = vmatmul.f32.gmra.mxu0 %v1557
        %v1669 = vpop.f32.mrf.mxu0
        %v1670 = vadd.f32 0.0, %v1669
        %1671 = vmatmul.f32.gmra.mxu0 %v1560
        %v1672 = vpop.f32.mrf.mxu0
        %v1673 = vadd.f32 0.0, %v1672
        %1674 = vmatmul.f32.gmra.mxu0 %v1563
        %v1675 = vpop.f32.mrf.mxu0
        %v1676 = vadd.f32 0.0, %v1675
        %1677 = vmatmul.f32.gmra.mxu0 %v1566
        %v1678 = vpop.f32.mrf.mxu0
        %v1679 = vadd.f32 0.0, %v1678
        %1680 = vmatmul.f32.gmra.mxu0 %v1569
        %v1681 = vpop.f32.mrf.mxu0
        %v1682 = vadd.f32 0.0, %v1681
        %1683 = vmatmul.f32.gmra.mxu0 %v1572
        %v1684 = vpop.f32.mrf.mxu0
        %v1685 = vadd.f32 0.0, %v1684
        %1686 = vmatmul.f32.gmra.mxu0 %v1575
        %v1687 = vpop.f32.mrf.mxu0
        %v1688 = vadd.f32 0.0, %v1687
        %1689 = vmatmul.f32.gmra.mxu0 %v1578
        %v1690 = vpop.f32.mrf.mxu0
        %v1691 = vadd.f32 0.0, %v1690
        %1692 = vmatmul.f32.gmra.mxu0 %v1581
        %v1693 = vpop.f32.mrf.mxu0
        %v1694 = vadd.f32 0.0, %v1693
        %1695 = vmatmul.f32.gmra.mxu0 %v1584
        %v1696 = vpop.f32.mrf.mxu0
        %v1697 = vadd.f32 0.0, %v1696
        %1698 = vmatmul.f32.gmra.mxu0 %v1587
        %v1699 = vpop.f32.mrf.mxu0
        %v1700 = vadd.f32 0.0, %v1699
        %1701 = vmatmul.f32.gmra.mxu0 %v1590
        %v1702 = vpop.f32.mrf.mxu0
        %v1703 = vadd.f32 0.0, %v1702
        %1704 = vmatmul.f32.gmra.mxu0 %v1593
        %v1705 = vpop.f32.mrf.mxu0
        %v1706 = vadd.f32 0.0, %v1705
        %1707 = vmatmul.f32.gmra.mxu0 %v1596
        %v1708 = vpop.f32.mrf.mxu0
        %v1709 = vadd.f32 0.0, %v1708
        %1710 = vmatmul.f32.gmra.mxu0 %v1599
        %v1711 = vpop.f32.mrf.mxu0
        %v1712 = vadd.f32 0.0, %v1711
        %1713 = vmatmul.f32.gmra.mxu0 %v1602
        %v1714 = vpop.f32.mrf.mxu0
        %v1715 = vadd.f32 0.0, %v1714
        %1716 = vmatmul.f32.gmra.mxu0 %v1605
        %v1717 = vpop.f32.mrf.mxu0
        %v1718 = vadd.f32 0.0, %v1717
        %1719 = vmatmul.f32.gmra.mxu0 %v1608
        %v1720 = vpop.f32.mrf.mxu0
        %v1721 = vadd.f32 0.0, %v1720
        %1722 = vmatmul.f32.gmra.mxu0 %v1611
        %v1723 = vpop.f32.mrf.mxu0
        %v1724 = vadd.f32 0.0, %v1723
        %1725 = vmatmul.f32.gmra.mxu0 %v1614
        %v1726 = vpop.f32.mrf.mxu0
        %v1727 = vadd.f32 0.0, %v1726
        %1728 = vmatmul.f32.gmra.mxu0 %v1617
        %v1729 = vpop.f32.mrf.mxu0
        %v1730 = vadd.f32 0.0, %v1729
        %1731 = vmatmul.f32.gmra.mxu0 %v1620
        %v1732 = vpop.f32.mrf.mxu0
        %v1733 = vadd.f32 0.0, %v1732
        %1734 = vmatmul.f32.gmra.mxu0 %v1623
        %v1735 = vpop.f32.mrf.mxu0
        %v1736 = vadd.f32 0.0, %v1735
        %1737 = vmatmul.f32.gmra.mxu0 %v1626
        %v1738 = vpop.f32.mrf.mxu0
        %v1739 = vadd.f32 0.0, %v1738
        %1740 = vdwg.mxu0
        %1742 = vset.pattern.permute.xlu0 0
        %1743 = vperm.xlu0 %1742, %v1468
        %v1744 = vpop.permute.xlu0 %1743
        %1747 = vset.pattern.permute.xlu0 0
        %1748 = vperm.xlu0 %1747, %v1469
        %v1749 = vpop.permute.xlu0 %1748
        %1752 = vset.pattern.permute.xlu0 0
        %1753 = vperm.xlu0 %1752, %v1470
        %v1754 = vpop.permute.xlu0 %1753
        %1757 = vset.pattern.permute.xlu0 0
        %1758 = vperm.xlu0 %1757, %v1471
        %v1759 = vpop.permute.xlu0 %1758
        %1762 = vset.pattern.permute.xlu0 0
        %1763 = vperm.xlu0 %1762, %v1472
        %v1764 = vpop.permute.xlu0 %1763
        %1767 = vset.pattern.permute.xlu0 0
        %1768 = vperm.xlu0 %1767, %v1473
        %v1769 = vpop.permute.xlu0 %1768
        %1772 = vset.pattern.permute.xlu0 0
        %1773 = vperm.xlu0 %1772, %v1474
        %v1774 = vpop.permute.xlu0 %1773
        %1777 = vset.pattern.permute.xlu0 0
        %1778 = vperm.xlu0 %1777, %v1475
        %v1779 = vpop.permute.xlu0 %1778
        %1782 = vset.pattern.permute.xlu0 0
        %1783 = vperm.xlu0 %1782, %v1476
        %v1784 = vpop.permute.xlu0 %1783
        %1787 = vset.pattern.permute.xlu0 0
        %1788 = vperm.xlu0 %1787, %v1477
        %v1789 = vpop.permute.xlu0 %1788
        %1792 = vset.pattern.permute.xlu0 0
        %1793 = vperm.xlu0 %1792, %v1478
        %v1794 = vpop.permute.xlu0 %1793
        %1797 = vset.pattern.permute.xlu0 0
        %1798 = vperm.xlu0 %1797, %v1479
        %v1799 = vpop.permute.xlu0 %1798
        %1802 = vset.pattern.permute.xlu0 0
        %1803 = vperm.xlu0 %1802, %v1480
        %v1804 = vpop.permute.xlu0 %1803
        %1807 = vset.pattern.permute.xlu0 0
        %1808 = vperm.xlu0 %1807, %v1481
        %v1809 = vpop.permute.xlu0 %1808
        %1812 = vset.pattern.permute.xlu0 0
        %1813 = vperm.xlu0 %1812, %v1482
        %v1814 = vpop.permute.xlu0 %1813
        %1817 = vset.pattern.permute.xlu0 0
        %1818 = vperm.xlu0 %1817, %v1483
        %v1819 = vpop.permute.xlu0 %1818
        %1822 = vset.pattern.permute.xlu0 0
        %1823 = vperm.xlu0 %1822, %v1484
        %v1824 = vpop.permute.xlu0 %1823
        %1827 = vset.pattern.permute.xlu0 0
        %1828 = vperm.xlu0 %1827, %v1485
        %v1829 = vpop.permute.xlu0 %1828
        %1832 = vset.pattern.permute.xlu0 0
        %1833 = vperm.xlu0 %1832, %v1486
        %v1834 = vpop.permute.xlu0 %1833
        %1837 = vset.pattern.permute.xlu0 0
        %1838 = vperm.xlu0 %1837, %v1487
        %v1839 = vpop.permute.xlu0 %1838
        %1842 = vset.pattern.permute.xlu0 0
        %1843 = vperm.xlu0 %1842, %v1488
        %v1844 = vpop.permute.xlu0 %1843
        %1847 = vset.pattern.permute.xlu0 0
        %1848 = vperm.xlu0 %1847, %v1489
        %v1849 = vpop.permute.xlu0 %1848
        %1852 = vset.pattern.permute.xlu0 0
        %1853 = vperm.xlu0 %1852, %v1490
        %v1854 = vpop.permute.xlu0 %1853
        %1857 = vset.pattern.permute.xlu0 0
        %1858 = vperm.xlu0 %1857, %v1491
        %v1859 = vpop.permute.xlu0 %1858
        %1862 = vset.pattern.permute.xlu0 0
        %1863 = vperm.xlu0 %1862, %v1492
        %v1864 = vpop.permute.xlu0 %1863
        %1867 = vset.pattern.permute.xlu0 0
        %1868 = vperm.xlu0 %1867, %v1493
        %v1869 = vpop.permute.xlu0 %1868
        %1872 = vset.pattern.permute.xlu0 0
        %1873 = vperm.xlu0 %1872, %v1494
        %v1874 = vpop.permute.xlu0 %1873
        %1877 = vset.pattern.permute.xlu0 0
        %1878 = vperm.xlu0 %1877, %v1495
        %v1879 = vpop.permute.xlu0 %1878
        %1882 = vset.pattern.permute.xlu0 0
        %1883 = vperm.xlu0 %1882, %v1496
        %v1884 = vpop.permute.xlu0 %1883
        %1887 = vset.pattern.permute.xlu0 0
        %1888 = vperm.xlu0 %1887, %v1497
        %v1889 = vpop.permute.xlu0 %1888
        %1892 = vset.pattern.permute.xlu0 0
        %1893 = vperm.xlu0 %1892, %v1498
        %v1894 = vpop.permute.xlu0 %1893
        %1897 = vset.pattern.permute.xlu0 0
        %1898 = vperm.xlu0 %1897, %v1499
        %v1899 = vpop.permute.xlu0 %1898
        %v1901 = vmul.f32 %v1744, %v1646
        %v1902 = vmul.f32 %v1749, %v1649
        %v1903 = vmul.f32 %v1754, %v1652
        %v1904 = vmul.f32 %v1759, %v1655
        %v1905 = vmul.f32 %v1764, %v1658
        %v1906 = vmul.f32 %v1769, %v1661
        %v1907 = vmul.f32 %v1774, %v1664
        %v1908 = vmul.f32 %v1779, %v1667
        %v1909 = vmul.f32 %v1784, %v1670
        %v1910 = vmul.f32 %v1789, %v1673
        %v1911 = vmul.f32 %v1794, %v1676
        %v1912 = vmul.f32 %v1799, %v1679
        %v1913 = vmul.f32 %v1804, %v1682
        %v1914 = vmul.f32 %v1809, %v1685
        %v1915 = vmul.f32 %v1814, %v1688
        %v1916 = vmul.f32 %v1819, %v1691
        %v1917 = vmul.f32 %v1824, %v1694
        %v1918 = vmul.f32 %v1829, %v1697
        %v1919 = vmul.f32 %v1834, %v1700
        %v1920 = vmul.f32 %v1839, %v1703
        %v1921 = vmul.f32 %v1844, %v1706
        %v1922 = vmul.f32 %v1849, %v1709
        %v1923 = vmul.f32 %v1854, %v1712
        %v1924 = vmul.f32 %v1859, %v1715
        %v1925 = vmul.f32 %v1864, %v1718
        %v1926 = vmul.f32 %v1869, %v1721
        %v1927 = vmul.f32 %v1874, %v1724
        %v1928 = vmul.f32 %v1879, %v1727
        %v1929 = vmul.f32 %v1884, %v1730
        %v1930 = vmul.f32 %v1889, %v1733
        %v1931 = vmul.f32 %v1894, %v1736
        %v1932 = vmul.f32 %v1899, %v1739
        %v1933 = vsel %vm320, %v1901, 0.0
        %v1934 = vrot.slane %v1933, 4
        %v1935 = vadd.f32 %v1933, %v1934
        %v1936 = vrot.slane %v1935, 2
        %v1937 = vadd.f32 %v1935, %v1936
        %v1938 = vrot.slane %v1937, 1
        %v1939 = vadd.f32 %v1937, %v1938
        %v1940 = vsel %vm320, %v1902, 0.0
        %v1941 = vrot.slane %v1940, 4
        %v1942 = vadd.f32 %v1940, %v1941
        %v1943 = vrot.slane %v1942, 2
        %v1944 = vadd.f32 %v1942, %v1943
        %v1945 = vrot.slane %v1944, 1
        %v1946 = vadd.f32 %v1944, %v1945
        %v1947 = vsel %vm320, %v1903, 0.0
        %v1948 = vrot.slane %v1947, 4
        %v1949 = vadd.f32 %v1947, %v1948
        %v1950 = vrot.slane %v1949, 2
        %v1951 = vadd.f32 %v1949, %v1950
        %v1952 = vrot.slane %v1951, 1
        %v1953 = vadd.f32 %v1951, %v1952
        %v1954 = vsel %vm320, %v1904, 0.0
        %v1955 = vrot.slane %v1954, 4
        %v1956 = vadd.f32 %v1954, %v1955
        %v1957 = vrot.slane %v1956, 2
        %v1958 = vadd.f32 %v1956, %v1957
        %v1959 = vrot.slane %v1958, 1
        %v1960 = vadd.f32 %v1958, %v1959
        %v1961 = vsel %vm320, %v1905, 0.0
        %v1962 = vrot.slane %v1961, 4
        %v1963 = vadd.f32 %v1961, %v1962
        %v1964 = vrot.slane %v1963, 2
        %v1965 = vadd.f32 %v1963, %v1964
        %v1966 = vrot.slane %v1965, 1
        %v1967 = vadd.f32 %v1965, %v1966
        %v1968 = vsel %vm320, %v1906, 0.0
        %v1969 = vrot.slane %v1968, 4
        %v1970 = vadd.f32 %v1968, %v1969
        %v1971 = vrot.slane %v1970, 2
        %v1972 = vadd.f32 %v1970, %v1971
        %v1973 = vrot.slane %v1972, 1
        %v1974 = vadd.f32 %v1972, %v1973
        %v1975 = vsel %vm320, %v1907, 0.0
        %v1976 = vrot.slane %v1975, 4
        %v1977 = vadd.f32 %v1975, %v1976
        %v1978 = vrot.slane %v1977, 2
        %v1979 = vadd.f32 %v1977, %v1978
        %v1980 = vrot.slane %v1979, 1
        %v1981 = vadd.f32 %v1979, %v1980
        %v1982 = vsel %vm320, %v1908, 0.0
        %v1983 = vrot.slane %v1982, 4
        %v1984 = vadd.f32 %v1982, %v1983
        %v1985 = vrot.slane %v1984, 2
        %v1986 = vadd.f32 %v1984, %v1985
        %v1987 = vrot.slane %v1986, 1
        %v1988 = vadd.f32 %v1986, %v1987
        %v1989 = vsel %vm320, %v1909, 0.0
        %v1990 = vrot.slane %v1989, 4
        %v1991 = vadd.f32 %v1989, %v1990
        %v1992 = vrot.slane %v1991, 2
        %v1993 = vadd.f32 %v1991, %v1992
        %v1994 = vrot.slane %v1993, 1
        %v1995 = vadd.f32 %v1993, %v1994
        %v1996 = vsel %vm320, %v1910, 0.0
        %v1997 = vrot.slane %v1996, 4
        %v1998 = vadd.f32 %v1996, %v1997
        %v1999 = vrot.slane %v1998, 2
        %v2000 = vadd.f32 %v1998, %v1999
        %v2001 = vrot.slane %v2000, 1
        %v2002 = vadd.f32 %v2000, %v2001
        %v2003 = vsel %vm320, %v1911, 0.0
        %v2004 = vrot.slane %v2003, 4
        %v2005 = vadd.f32 %v2003, %v2004
        %v2006 = vrot.slane %v2005, 2
        %v2007 = vadd.f32 %v2005, %v2006
        %v2008 = vrot.slane %v2007, 1
        %v2009 = vadd.f32 %v2007, %v2008
        %v2010 = vsel %vm320, %v1912, 0.0
        %v2011 = vrot.slane %v2010, 4
        %v2012 = vadd.f32 %v2010, %v2011
        %v2013 = vrot.slane %v2012, 2
        %v2014 = vadd.f32 %v2012, %v2013
        %v2015 = vrot.slane %v2014, 1
        %v2016 = vadd.f32 %v2014, %v2015
        %v2017 = vsel %vm320, %v1913, 0.0
        %v2018 = vrot.slane %v2017, 4
        %v2019 = vadd.f32 %v2017, %v2018
        %v2020 = vrot.slane %v2019, 2
        %v2021 = vadd.f32 %v2019, %v2020
        %v2022 = vrot.slane %v2021, 1
        %v2023 = vadd.f32 %v2021, %v2022
        %v2024 = vsel %vm320, %v1914, 0.0
        %v2025 = vrot.slane %v2024, 4
        %v2026 = vadd.f32 %v2024, %v2025
        %v2027 = vrot.slane %v2026, 2
        %v2028 = vadd.f32 %v2026, %v2027
        %v2029 = vrot.slane %v2028, 1
        %v2030 = vadd.f32 %v2028, %v2029
        %v2031 = vsel %vm320, %v1915, 0.0
        %v2032 = vrot.slane %v2031, 4
        %v2033 = vadd.f32 %v2031, %v2032
        %v2034 = vrot.slane %v2033, 2
        %v2035 = vadd.f32 %v2033, %v2034
        %v2036 = vrot.slane %v2035, 1
        %v2037 = vadd.f32 %v2035, %v2036
        %v2038 = vsel %vm320, %v1916, 0.0
        %v2039 = vrot.slane %v2038, 4
        %v2040 = vadd.f32 %v2038, %v2039
        %v2041 = vrot.slane %v2040, 2
        %v2042 = vadd.f32 %v2040, %v2041
        %v2043 = vrot.slane %v2042, 1
        %v2044 = vadd.f32 %v2042, %v2043
        %v2045 = vsel %vm320, %v1917, 0.0
        %v2046 = vrot.slane %v2045, 4
        %v2047 = vadd.f32 %v2045, %v2046
        %v2048 = vrot.slane %v2047, 2
        %v2049 = vadd.f32 %v2047, %v2048
        %v2050 = vrot.slane %v2049, 1
        %v2051 = vadd.f32 %v2049, %v2050
        %v2052 = vsel %vm320, %v1918, 0.0
        %v2053 = vrot.slane %v2052, 4
        %v2054 = vadd.f32 %v2052, %v2053
        %v2055 = vrot.slane %v2054, 2
        %v2056 = vadd.f32 %v2054, %v2055
        %v2057 = vrot.slane %v2056, 1
        %v2058 = vadd.f32 %v2056, %v2057
        %v2059 = vsel %vm320, %v1919, 0.0
        %v2060 = vrot.slane %v2059, 4
        %v2061 = vadd.f32 %v2059, %v2060
        %v2062 = vrot.slane %v2061, 2
        %v2063 = vadd.f32 %v2061, %v2062
        %v2064 = vrot.slane %v2063, 1
        %v2065 = vadd.f32 %v2063, %v2064
        %v2066 = vsel %vm320, %v1920, 0.0
        %v2067 = vrot.slane %v2066, 4
        %v2068 = vadd.f32 %v2066, %v2067
        %v2069 = vrot.slane %v2068, 2
        %v2070 = vadd.f32 %v2068, %v2069
        %v2071 = vrot.slane %v2070, 1
        %v2072 = vadd.f32 %v2070, %v2071
        %v2073 = vsel %vm320, %v1921, 0.0
        %v2074 = vrot.slane %v2073, 4
        %v2075 = vadd.f32 %v2073, %v2074
        %v2076 = vrot.slane %v2075, 2
        %v2077 = vadd.f32 %v2075, %v2076
        %v2078 = vrot.slane %v2077, 1
        %v2079 = vadd.f32 %v2077, %v2078
        %v2080 = vsel %vm320, %v1922, 0.0
        %v2081 = vrot.slane %v2080, 4
        %v2082 = vadd.f32 %v2080, %v2081
        %v2083 = vrot.slane %v2082, 2
        %v2084 = vadd.f32 %v2082, %v2083
        %v2085 = vrot.slane %v2084, 1
        %v2086 = vadd.f32 %v2084, %v2085
        %v2087 = vsel %vm320, %v1923, 0.0
        %v2088 = vrot.slane %v2087, 4
        %v2089 = vadd.f32 %v2087, %v2088
        %v2090 = vrot.slane %v2089, 2
        %v2091 = vadd.f32 %v2089, %v2090
        %v2092 = vrot.slane %v2091, 1
        %v2093 = vadd.f32 %v2091, %v2092
        %v2094 = vsel %vm320, %v1924, 0.0
        %v2095 = vrot.slane %v2094, 4
        %v2096 = vadd.f32 %v2094, %v2095
        %v2097 = vrot.slane %v2096, 2
        %v2098 = vadd.f32 %v2096, %v2097
        %v2099 = vrot.slane %v2098, 1
        %v2100 = vadd.f32 %v2098, %v2099
        %v2101 = vsel %vm320, %v1925, 0.0
        %v2102 = vrot.slane %v2101, 4
        %v2103 = vadd.f32 %v2101, %v2102
        %v2104 = vrot.slane %v2103, 2
        %v2105 = vadd.f32 %v2103, %v2104
        %v2106 = vrot.slane %v2105, 1
        %v2107 = vadd.f32 %v2105, %v2106
        %v2108 = vsel %vm320, %v1926, 0.0
        %v2109 = vrot.slane %v2108, 4
        %v2110 = vadd.f32 %v2108, %v2109
        %v2111 = vrot.slane %v2110, 2
        %v2112 = vadd.f32 %v2110, %v2111
        %v2113 = vrot.slane %v2112, 1
        %v2114 = vadd.f32 %v2112, %v2113
        %v2115 = vsel %vm320, %v1927, 0.0
        %v2116 = vrot.slane %v2115, 4
        %v2117 = vadd.f32 %v2115, %v2116
        %v2118 = vrot.slane %v2117, 2
        %v2119 = vadd.f32 %v2117, %v2118
        %v2120 = vrot.slane %v2119, 1
        %v2121 = vadd.f32 %v2119, %v2120
        %v2122 = vsel %vm320, %v1928, 0.0
        %v2123 = vrot.slane %v2122, 4
        %v2124 = vadd.f32 %v2122, %v2123
        %v2125 = vrot.slane %v2124, 2
        %v2126 = vadd.f32 %v2124, %v2125
        %v2127 = vrot.slane %v2126, 1
        %v2128 = vadd.f32 %v2126, %v2127
        %v2129 = vsel %vm320, %v1929, 0.0
        %v2130 = vrot.slane %v2129, 4
        %v2131 = vadd.f32 %v2129, %v2130
        %v2132 = vrot.slane %v2131, 2
        %v2133 = vadd.f32 %v2131, %v2132
        %v2134 = vrot.slane %v2133, 1
        %v2135 = vadd.f32 %v2133, %v2134
        %v2136 = vsel %vm320, %v1930, 0.0
        %v2137 = vrot.slane %v2136, 4
        %v2138 = vadd.f32 %v2136, %v2137
        %v2139 = vrot.slane %v2138, 2
        %v2140 = vadd.f32 %v2138, %v2139
        %v2141 = vrot.slane %v2140, 1
        %v2142 = vadd.f32 %v2140, %v2141
        %v2143 = vsel %vm320, %v1931, 0.0
        %v2144 = vrot.slane %v2143, 4
        %v2145 = vadd.f32 %v2143, %v2144
        %v2146 = vrot.slane %v2145, 2
        %v2147 = vadd.f32 %v2145, %v2146
        %v2148 = vrot.slane %v2147, 1
        %v2149 = vadd.f32 %v2147, %v2148
        %v2150 = vsel %vm320, %v1932, 0.0
        %v2151 = vrot.slane %v2150, 4
        %v2152 = vadd.f32 %v2150, %v2151
        %v2153 = vrot.slane %v2152, 2
        %v2154 = vadd.f32 %v2152, %v2153
        %v2155 = vrot.slane %v2154, 1
        %v2156 = vadd.f32 %v2154, %v2155
        %vm2189 = vcmask 1041409
        %v2190 = vsel %vm2189, %v1946, %v1939
        %vm2191 = vcmask 1042434
        %v2192 = vsel %vm2191, %v1953, %v2190
        %vm2193 = vcmask 1043459
        %v2194 = vsel %vm2193, %v1960, %v2192
        %vm2195 = vcmask 1044484
        %v2196 = vsel %vm2195, %v1967, %v2194
        %vm2197 = vcmask 1045509
        %v2198 = vsel %vm2197, %v1974, %v2196
        %vm2199 = vcmask 1046534
        %v2200 = vsel %vm2199, %v1981, %v2198
        %vm2201 = vcmask 1047559
        %v2202 = vsel %vm2201, %v1988, %v2200
        %v2203 = vsel %vm2189, %v2002, %v1995
        %v2204 = vsel %vm2191, %v2009, %v2203
        %v2205 = vsel %vm2193, %v2016, %v2204
        %v2206 = vsel %vm2195, %v2023, %v2205
        %v2207 = vsel %vm2197, %v2030, %v2206
        %v2208 = vsel %vm2199, %v2037, %v2207
        %v2209 = vsel %vm2201, %v2044, %v2208
        %v2210 = vsel %vm2189, %v2058, %v2051
        %v2211 = vsel %vm2191, %v2065, %v2210
        %v2212 = vsel %vm2193, %v2072, %v2211
        %v2213 = vsel %vm2195, %v2079, %v2212
        %v2214 = vsel %vm2197, %v2086, %v2213
        %v2215 = vsel %vm2199, %v2093, %v2214
        %v2216 = vsel %vm2201, %v2100, %v2215
        %v2217 = vsel %vm2189, %v2114, %v2107
        %v2218 = vsel %vm2191, %v2121, %v2217
        %v2219 = vsel %vm2193, %v2128, %v2218
        %v2220 = vsel %vm2195, %v2135, %v2219
        %v2221 = vsel %vm2197, %v2142, %v2220
        %v2222 = vsel %vm2199, %v2149, %v2221
        %v2223 = vsel %vm2201, %v2156, %v2222
        %v2228 = vadd.f32 %v307, %v2202
        %v2229 = vadd.f32 %v308, %v2209
        %v2230 = vadd.f32 %v309, %v2216
        %v2231 = vadd.f32 %v310, %v2223
        %2232 = vst.msk [vmem:[%s299] sm:$0xff] %vm320, %v2228
        %2233 = vst.msk [vmem:[%s299 + $0x8] sm:$0xff] %vm320, %v2229
        %2234 = vst.msk [vmem:[%s299 + $0x10] sm:$0xff] %vm320, %v2230
        %2235 = vst.msk [vmem:[%s299 + $0x18] sm:$0xff] %vm320, %v2231
        %s2236 = sand.u32 %s203, 1
        %s2237 = scalar_lea.sflag [#allocation3], %s2236
        %s2238 = sand.u32 %s203, 1
        %s2239 = smul.addr %s2238, 32
        %s2240 = scalar_lea.vmem [#allocation2], %s2239
        // Predicated region
        $region53: #{gap_junction_forward_batched.1} parent=51 // pred_check
          %p2241 = pneg %p213
        $region54: #{gap_junction_forward_batched.1} parent=51 // pred_check_branch
          %2243 = sbr.rel (%p2241) target = $region56
        $region55: #{gap_junction_forward_batched.1} parent=51 // pred_region
          %s2244 = smul.u32 4, %s22
          %2246 = vsyncadd %s2237, 0
          %s2247 = smul.addr %s2244, 8
          %s2248 = scalar_lea.hbm %s8, %s2247
          %s2249 = sshll.u32 %s2240, 4
          %s2250 = int_to_ptr.vmem [resolvable:$true] %s2249
          %s2251 = sshll.u32 %s2248, 4
          %s2252 = int_to_ptr.hbm [resolvable:$true] %s2251
          %2257 = dma.vmem_to_hbm [thread:$0]  %s2250, 512, %s2252, %s2237, 128, 128, 8
        $region56: #{gap_junction_forward_batched.1} parent=51 // pred_fallthru
          _
      $region52: #{gap_junction_forward_batched.1} parent=5 // pred_fallthru
        _
      %p2258 = scmp.le.s32.totalorder 2, %s17
      // Predicated region
      $region57: #{gap_junction_forward_batched.1} parent=5 // pred_check
        %p2259 = pneg %p2258
      $region58: #{gap_junction_forward_batched.1} parent=5 // pred_check_branch
        %2261 = sbr.rel (%p2259) target = $region60
      $region59: #{gap_junction_forward_batched.1} parent=5 // pred_region
        %s2262 = ssub.s32 %s17, 2
        // Predicated region
        $region61: #{gap_junction_forward_batched.1} parent=59 // pred_check
          %p2263 = pneg %p219
        $region62: #{gap_junction_forward_batched.1} parent=59 // pred_check_branch
          %2265 = sbr.rel (%p2263) target = $region64
        $region63: #{gap_junction_forward_batched.1} parent=59 // pred_region
          %s2266 = sand.u32 %s204, 1
          %s2267 = scalar_lea.sflag [#allocation3], %s2266
          %s2268 = sand.u32 %s204, 1
          %s2269 = smul.addr %s2268, 32
          %s2270 = scalar_lea.vmem [#allocation2], %s2269
          %2272 = dma.done %s2267, 512
        $region64: #{gap_junction_forward_batched.1} parent=59 // pred_fallthru
          _
      $region60: #{gap_junction_forward_batched.1} parent=5 // pred_fallthru
        _
    $region6: #{gap_junction_forward_batched.1} parent=1 // loop_footer
      %s21 = sadd.s32 1, %s17
    $region7: #{gap_junction_forward_batched.1} parent=1 // loop_footer_branch
      %16 = sbr.rel target = $region3
    $region8: #{gap_junction_forward_batched.1} parent=1 // loop_exit
      _
    %2273 = vsyncpa [#allocation3], 1
    %s2274 = scalar_lea.sflag [#allocation3], 1
    %2275 = vsyncpa %s2274, 1

</llo_original>
